<compile_context>
chip_gen: v6e
topology: v6e:2x2x1
jax: 0.10.0
libtpu: 0.0.40
codegen_flags: <defaults>
</compile_context>

<pallas_src>
import math
import numpy as np

import jax
import jax.numpy as jnp
from jax.experimental import pallas as pl
from jax.experimental.pallas import tpu as pltpu


# ----------------------------------------------------------------------------
# Host-side construction of the basis tables (replaces sympy + scipy.brentq).
# ----------------------------------------------------------------------------
def _sph_jn_scalar(x, n):
    """Spherical Bessel function j_n(x) for scalar x (upward recurrence)."""
    j0 = math.sin(x) / x
    if n == 0:
        return j0
    j1 = math.sin(x) / (x * x) - math.cos(x) / x
    if n == 1:
        return j1
    jm1, jc = j0, j1
    for i in range(2, n + 1):
        jm1, jc = jc, (2 * i - 1) / x * jc - jm1
    return jc


def _sph_jn_vec(x, n):
    """Vectorized spherical Bessel j_n(x) (numpy float64, reference path)."""
    j0 = np.sin(x) / x
    if n == 0:
        return j0
    j1 = np.sin(x) / x**2 - np.cos(x) / x
    if n == 1:
        return j1
    jm1, jc = j0, j1
    for i in range(2, n + 1):
        jm1, jc = jc, (2 * i - 1) / x * jc - jm1
    return jc


def _bisect_zero(f, lo, hi, iters=200):
    flo, fhi = f(lo), f(hi)
    assert flo * fhi < 0.0, "bracket does not contain a sign change"
    for _ in range(iters):
        mid = 0.5 * (lo + hi)
        fm = f(mid)
        if fm == 0.0:
            return mid
        if flo * fm < 0.0:
            hi, fhi = mid, fm
        else:
            lo, flo = mid, fm
    return 0.5 * (lo + hi)


def _sph_jn_zeros(n, k):
    """First k positive zeros of spherical Bessel j_i for i = 0..n-1."""
    zerosj = np.zeros((n, k), dtype=np.float64)
    zerosj[0] = np.arange(1, k + 1) * np.pi
    points = np.arange(1, k + n) * np.pi
    racines = np.zeros(k + n - 1, dtype=np.float64)
    for i in range(1, n):
        for j in range(k + n - 1 - i):
            racines[j] = _bisect_zero(lambda r: _sph_jn_scalar(r, i),
                                      points[j], points[j + 1])
        points = racines.copy()
        zerosj[i, :k] = racines[:k]
    return zerosj


def _round_up(x, m):
    return ((x + m - 1) // m) * m


# ----------------------------------------------------------------------------
# Pallas kernel + wrapper.
# ----------------------------------------------------------------------------
def make_spherical_basis(num_spherical, num_radial, cutoff=5.0,
                         envelope_exponent=5, tile_t=4096,
                         out_dtype=jnp.float32):
    assert num_radial <= 64
    ns, nr = num_spherical, num_radial
    nk = ns * nr
    nk_pad = _round_up(nk, 8)          # NK on sublanes, padded to multiple of 8

    # Envelope coefficients.
    p = envelope_exponent + 1
    ea = -(p + 1) * (p + 2) / 2
    eb = p * (p + 2)
    ec = -p * (p + 1) / 2
    inv_cutoff = 1.0 / cutoff

    # Basis tables (deterministic, no checkpoint).
    zeros = _sph_jn_zeros(ns, nr)                          # (ns, nr)
    norms = np.zeros((ns, nr), dtype=np.float64)
    for i in range(ns):
        for j in range(nr):
            norms[i, j] = 1.0 / math.sqrt(
                0.5 * _sph_jn_scalar(zeros[i, j], i + 1) ** 2)
    pref = np.array([math.sqrt((2 * i + 1) / (4.0 * math.pi))
                     for i in range(ns)])                  # sph-harm Y_i^0 prefactor

    # Per-row constant table (rows = basis columns in the PyTorch layout,
    # row r -> spherical order r // nr, radial index r % nr):
    #   col 0           : Bessel zero z_{i,j}
    #   col 1 + i       : per-order selector holding the radial normalizer
    #                     N_{i,j} (normalizer folded in -> no extra multiply)
    #   col 1 + ns + i  : per-order selector holding the Y_i^0 prefactor
    tab = np.zeros((nk_pad, 1 + 2 * ns), dtype=np.float32)
    tab[:, 0] = math.pi                                    # safe arg for pad rows
    tab[:nk, 0] = zeros.reshape(nk)
    for i in range(ns):
        rows = slice(i * nr, (i + 1) * nr)
        tab[rows, 1 + i] = norms[i]
        tab[rows, 1 + ns + i] = pref[i]
    tab_dev = jnp.asarray(tab)

    # 2 TensorCores per chip (v7x)? -> keep >= 2 balanced grid steps there.
    try:
        kind = jax.devices()[0].device_kind.lower()
    except Exception:
        kind = ""
    multi_tc = "v7" in kind

    def kernel(da_ref, tab_ref, out_ref):
        d = da_ref[0:1, :] * inv_cutoff               # (1, T)  normalized distance
        ang = da_ref[1:2, :]                          # (1, T)

        # Envelope u(d) = 1/d + a d^(p-1) + b d^p + c d^(p+1).
        # EUP approx reciprocal + one Newton step (the envelope cancels toward
        # zero near d=1, so the raw ~2^-12 vrcp error is not acceptable).
        inv_d = pl.reciprocal(d, approx=True)
        inv_d = inv_d * (2.0 - d * inv_d)
        xp0 = d ** (p - 1)
        xp1 = xp0 * d
        xp2 = xp1 * d
        env = inv_d + ea * xp0 + eb * xp1 + ec * xp2  # (1, T)

        z = tab_ref[:, 0:1]                           # (NKp, 1) Bessel zeros

        # Radial basis: N_ij * j_i(z_ij * d) per row, via the scaled recurrence
        # g_i = x^(i+1) j_i  (g_0 = sin x, g_1 = sin x - x cos x,
        # g_i = (2i-1) g_{i-1} - x^2 g_{i-2}); the reciprocal only enters as a
        # final multiplicative factor j_i = g_i * inv_x^(i+1).
        arg = z * d                                   # (NKp, T)
        inv_arg = pl.reciprocal(arg, approx=True)     # EUP slot
        inv_arg = inv_arg * (2.0 - arg * inv_arg)     # Newton step: error ~e^2
        sin_a = jnp.sin(arg)
        cos_a = jnp.cos(arg)

        g_prev = sin_a                                # g_0 = sin x
        inv_pow = inv_arg                             # inv_arg^1
        bess = (g_prev * inv_pow) * tab_ref[:, 1:2]   # norm-folded selector, order 0
        if ns >= 2:
            g_cur = sin_a - arg * cos_a               # g_1 = sin x - x cos x
            inv_pow = inv_pow * inv_arg
            bess = bess + (g_cur * inv_pow) * tab_ref[:, 2:3]
            x2 = arg * arg
            for i in range(2, ns):
                g_next = (2 * i - 1) * g_cur - x2 * g_prev
                inv_pow = inv_pow * inv_arg
                bess = bess + (g_next * inv_pow) * tab_ref[:, 1 + i:2 + i]
                g_prev, g_cur = g_cur, g_next
        # TODO(synk): add a small-x power-series fallback for high spherical
        # orders at very short distances (f32 upward recurrence cancels there;
        # the original torch-f32 sympy closed forms share the same issue).

        # Angular basis: Y_i^0(theta) = pref_i * P_i(cos theta), selected per
        # row via the prefactor-folded selector columns.  (For num_spherical
        # >= ~7 a small MXU matmul P(ns,T) x sel(NKp,ns) could offload these
        # MACs from the VALU; kept on the VPU here for simplicity.)
        ct = jnp.cos(ang)                             # (1, T)
        p_prev = jnp.ones_like(ct)                    # P_0
        cbf = tab_ref[:, 1 + ns:2 + ns] * p_prev
        if ns >= 2:
            p_cur = ct                                # P_1
            cbf = cbf + tab_ref[:, 2 + ns:3 + ns] * p_cur
            for i in range(2, ns):
                p_next = ((2 * i - 1) * ct * p_cur
                          - (i - 1) * p_prev) * (1.0 / i)
                cbf = cbf + tab_ref[:, 1 + ns + i:2 + ns + i] * p_next
                p_prev, p_cur = p_cur, p_next

        out_ref[...] = (env * bess * cbf).astype(out_ref.dtype)

    def _forward(dist, angle, idx_kj):
        t = angle.shape[0]
        # Large lane-dense tiles (default 4096 triplet lanes).  No forced tile
        # shrinking on single-TensorCore chips (v5e/v6e); on v7x split so both
        # TensorCores get a grid step.
        t128 = _round_up(max(t, 1), 128)
        tile = max(128, min(_round_up(tile_t, 128), t128))
        if multi_tc and t128 >= 256 and t128 <= tile:
            tile = _round_up(t128 // 2, 128)
        t_pad = _round_up(t, tile)

        # Glue (fused under the same jit as the kernel): scalar gather
        # dist[idx_kj]; merge with angle into one (2, T_pad) slab (single
        # per-step DMA).  Padding with `cutoff` keeps d > 0 and env finite;
        # padded columns are sliced off below.
        d_kj = dist[idx_kj].astype(jnp.float32)
        da = jnp.stack([d_kj, angle.astype(jnp.float32)], axis=0)
        da = jnp.pad(da, ((0, 0), (0, t_pad - t)), constant_values=cutoff)

        out = pl.pallas_call(
            kernel,
            out_shape=jax.ShapeDtypeStruct((nk_pad, t_pad), out_dtype),
            grid_spec=pltpu.PrefetchScalarGridSpec(
                num_scalar_prefetch=0,
                grid=(t_pad // tile,),
                in_specs=[
                    pl.BlockSpec((2, tile), lambda i: (0, i)),             # [d_kj; angle]
                    pl.BlockSpec((nk_pad, 1 + 2 * ns), lambda i: (0, 0)),  # constants
                ],
                out_specs=pl.BlockSpec((nk_pad, tile), lambda i: (0, i)),
            ),
            compiler_params=pltpu.CompilerParams(
                dimension_semantics=("parallel",)),
        )(da, tab_dev)
        # Back to the PyTorch (T, ns*nr) layout (fused with the slice by XLA
        # under this jit; downstream consumers should be jitted together too).
        return out[:nk, :t].T

    forward = jax.jit(_forward)
    tables = dict(zeros=zeros, norms=norms, pref=pref)
    return forward, tables


# ----------------------------------------------------------------------------
# Pure-numpy float64 reference (same math as the PyTorch module).
# ----------------------------------------------------------------------------
def reference_forward(dist, angle, idx_kj, tables, num_spherical, num_radial,
                      cutoff, envelope_exponent):
    ns, nr = num_spherical, num_radial
    p = envelope_exponent + 1
    a = -(p + 1) * (p + 2) / 2
    b = p * (p + 2)
    c = -p * (p + 1) / 2
    zeros, norms, pref = tables["zeros"], tables["norms"], tables["pref"]

    d = dist.astype(np.float64) / cutoff
    env = 1.0 / d + a * d ** (p - 1) + b * d ** p + c * d ** (p + 1)
    rbf = np.zeros((d.shape[0], ns, nr), dtype=np.float64)
    for i in range(ns):
        for j in range(nr):
            rbf[:, i, j] = norms[i, j] * _sph_jn_vec(zeros[i, j] * d, i)
    rbf = env[:, None, None] * rbf

    ct = np.cos(angle.astype(np.float64))
    cbf = np.zeros((angle.shape[0], ns), dtype=np.float64)
    p_prev = np.ones_like(ct)
    cbf[:, 0] = pref[0] * p_prev
    if ns >= 2:
        p_cur = ct
        cbf[:, 1] = pref[1] * p_cur
        for i in range(2, ns):
            p_next = ((2 * i - 1) * ct * p_cur - (i - 1) * p_prev) / i
            cbf[:, i] = pref[i] * p_next
            p_prev, p_cur = p_cur, p_next

    out = rbf[idx_kj] * cbf[:, :, None]
    return out.reshape(-1, ns * nr)


# ----------------------------------------------------------------------------
# Demo / self-check.
# ----------------------------------------------------------------------------
if __name__ == "__main__":
    cutoff, envelope_exponent = 5.0, 5
    configs = [
        # (num_spherical, num_radial, E, T, dist_lo, dist_hi)
        (3, 6, 32, 200, 0.5, 4.5),
        # Typical DimeNet config.  Distances kept >= 2.0 so the f32 upward
        # Bessel recurrence stays in its well-conditioned regime (see TODO).
        (7, 6, 48, 320, 2.0, 4.5),
    ]

    key = jax.random.PRNGKey(0)
    for (num_spherical, num_radial, E, T, dlo, dhi) in configs:
        key, k1, k2, k3 = jax.random.split(key, 4)
        dist = jax.random.uniform(k1, (E,), jnp.float32, dlo, dhi)
        angle = jax.random.uniform(k2, (T,), jnp.float32, 0.0, float(np.pi))
        idx_kj = jax.random.randint(k3, (T,), 0, E, jnp.int32)

        forward, tables = make_spherical_basis(num_spherical, num_radial,
                                               cutoff, envelope_exponent)
        out = jax.block_until_ready(forward(dist, angle, idx_kj))

        ref = reference_forward(np.asarray(dist), np.asarray(angle),
                                np.asarray(idx_kj), tables, num_spherical,
                                num_radial, cutoff, envelope_exponent)
        np.testing.assert_allclose(np.asarray(out), ref.astype(np.float32),
                                   rtol=2e-3, atol=2e-3)
    print("KERNEL_OK")
</pallas_src>

<mosaic_0001>
module attributes {stable_mosaic.version = 11 : i64} {
  func.func @kernel(%arg0: i32, %arg1: memref<2x256xf32, #tpu.memory_space<vmem>>, %arg2: memref<24x7xf32, #tpu.memory_space<vmem>>, %arg3: memref<24x256xf32, #tpu.memory_space<vmem>>) attributes {dimension_semantics = [#tpu.dimension_semantics<parallel>], iteration_bounds = array<i64: 1>, scalar_prefetch = 0 : i64, scratch_operands = 0 : i64, tpu.core_type = #tpu.core_type<tc>, window_params = [{transform_indices = @transform_0, window_bounds = array<i64: 2, 256>}, {pipeline_mode = #tpu.pipeline_mode<synchronous>, transform_indices = @transform_1, window_bounds = array<i64: 24, 7>}, {transform_indices = @transform_2, window_bounds = array<i64: 24, 256>}]} {
    %c0 = arith.constant 0 : index
    %c0_0 = arith.constant 0 : index
    %0 = vector.load %arg1[%c0, %c0_0] : memref<2x256xf32, #tpu.memory_space<vmem>>, vector<1x256xf32>
    %cst = arith.constant 2.000000e-01 : f32
    %1 = vector.broadcast %cst : f32 to vector<1x256xf32>
    %2 = arith.mulf %0, %1 : vector<1x256xf32>
    %c1 = arith.constant 1 : index
    %c0_1 = arith.constant 0 : index
    %3 = vector.load %arg1[%c1, %c0_1] : memref<2x256xf32, #tpu.memory_space<vmem>>, vector<1x256xf32>
    %4 = tpu.reciprocal %2 {approx = true} : vector<1x256xf32> -> vector<1x256xf32>
    %5 = arith.mulf %2, %4 : vector<1x256xf32>
    %cst_2 = arith.constant 2.000000e+00 : f32
    %6 = vector.broadcast %cst_2 : f32 to vector<1x256xf32>
    %7 = arith.subf %6, %5 : vector<1x256xf32>
    %8 = arith.mulf %4, %7 : vector<1x256xf32>
    %9 = arith.mulf %2, %2 : vector<1x256xf32>
    %10 = arith.mulf %9, %9 : vector<1x256xf32>
    %11 = arith.mulf %2, %10 : vector<1x256xf32>
    %12 = arith.mulf %11, %2 : vector<1x256xf32>
    %13 = arith.mulf %12, %2 : vector<1x256xf32>
    %cst_3 = arith.constant -2.800000e+01 : f32
    %14 = vector.broadcast %cst_3 : f32 to vector<1x256xf32>
    %15 = arith.mulf %14, %11 : vector<1x256xf32>
    %16 = arith.addf %8, %15 : vector<1x256xf32>
    %cst_4 = arith.constant 4.800000e+01 : f32
    %17 = vector.broadcast %cst_4 : f32 to vector<1x256xf32>
    %18 = arith.mulf %17, %12 : vector<1x256xf32>
    %19 = arith.addf %16, %18 : vector<1x256xf32>
    %cst_5 = arith.constant -2.100000e+01 : f32
    %20 = vector.broadcast %cst_5 : f32 to vector<1x256xf32>
    %21 = arith.mulf %20, %13 : vector<1x256xf32>
    %22 = arith.addf %19, %21 : vector<1x256xf32>
    %c0_6 = arith.constant 0 : index
    %c0_7 = arith.constant 0 : index
    %23 = vector.load %arg2[%c0_6, %c0_7] : memref<24x7xf32, #tpu.memory_space<vmem>>, vector<24x1xf32>
    %24 = vector.broadcast %23 : vector<24x1xf32> to vector<24x256xf32>
    %25 = vector.broadcast %2 : vector<1x256xf32> to vector<24x256xf32>
    %26 = arith.mulf %24, %25 : vector<24x256xf32>
    %27 = tpu.reciprocal %26 {approx = true} : vector<24x256xf32> -> vector<24x256xf32>
    %28 = arith.mulf %26, %27 : vector<24x256xf32>
    %cst_8 = arith.constant 2.000000e+00 : f32
    %29 = vector.broadcast %cst_8 : f32 to vector<24x256xf32>
    %30 = arith.subf %29, %28 : vector<24x256xf32>
    %31 = arith.mulf %27, %30 : vector<24x256xf32>
    %32 = math.sin %26 : vector<24x256xf32>
    %33 = math.cos %26 : vector<24x256xf32>
    %34 = arith.mulf %32, %31 : vector<24x256xf32>
    %c0_9 = arith.constant 0 : index
    %c1_10 = arith.constant 1 : index
    %35 = vector.load %arg2[%c0_9, %c1_10] : memref<24x7xf32, #tpu.memory_space<vmem>>, vector<24x1xf32>
    %36 = vector.broadcast %35 : vector<24x1xf32> to vector<24x256xf32>
    %37 = arith.mulf %34, %36 : vector<24x256xf32>
    %38 = arith.mulf %26, %33 : vector<24x256xf32>
    %39 = arith.subf %32, %38 : vector<24x256xf32>
    %40 = arith.mulf %31, %31 : vector<24x256xf32>
    %41 = arith.mulf %39, %40 : vector<24x256xf32>
    %c0_11 = arith.constant 0 : index
    %c2 = arith.constant 2 : index
    %42 = vector.load %arg2[%c0_11, %c2] : memref<24x7xf32, #tpu.memory_space<vmem>>, vector<24x1xf32>
    %43 = vector.broadcast %42 : vector<24x1xf32> to vector<24x256xf32>
    %44 = arith.mulf %41, %43 : vector<24x256xf32>
    %45 = arith.addf %37, %44 : vector<24x256xf32>
    %46 = arith.mulf %26, %26 : vector<24x256xf32>
    %cst_12 = arith.constant 3.000000e+00 : f32
    %47 = vector.broadcast %cst_12 : f32 to vector<24x256xf32>
    %48 = arith.mulf %47, %39 : vector<24x256xf32>
    %49 = arith.mulf %46, %32 : vector<24x256xf32>
    %50 = arith.subf %48, %49 : vector<24x256xf32>
    %51 = arith.mulf %40, %31 : vector<24x256xf32>
    %52 = arith.mulf %50, %51 : vector<24x256xf32>
    %c0_13 = arith.constant 0 : index
    %c3 = arith.constant 3 : index
    %53 = vector.load %arg2[%c0_13, %c3] : memref<24x7xf32, #tpu.memory_space<vmem>>, vector<24x1xf32>
    %54 = vector.broadcast %53 : vector<24x1xf32> to vector<24x256xf32>
    %55 = arith.mulf %52, %54 : vector<24x256xf32>
    %56 = arith.addf %45, %55 : vector<24x256xf32>
    %57 = math.cos %3 : vector<1x256xf32>
    %cst_14 = arith.constant 1.000000e+00 : f32
    %58 = vector.broadcast %cst_14 : f32 to vector<1x256xf32>
    %c0_15 = arith.constant 0 : index
    %c4 = arith.constant 4 : index
    %59 = vector.load %arg2[%c0_15, %c4] : memref<24x7xf32, #tpu.memory_space<vmem>>, vector<24x1xf32>
    %60 = vector.broadcast %59 : vector<24x1xf32> to vector<24x256xf32>
    %61 = vector.broadcast %58 : vector<1x256xf32> to vector<24x256xf32>
    %62 = arith.mulf %60, %61 : vector<24x256xf32>
    %c0_16 = arith.constant 0 : index
    %c5 = arith.constant 5 : index
    %63 = vector.load %arg2[%c0_16, %c5] : memref<24x7xf32, #tpu.memory_space<vmem>>, vector<24x1xf32>
    %64 = vector.broadcast %63 : vector<24x1xf32> to vector<24x256xf32>
    %65 = vector.broadcast %57 : vector<1x256xf32> to vector<24x256xf32>
    %66 = arith.mulf %64, %65 : vector<24x256xf32>
    %67 = arith.addf %62, %66 : vector<24x256xf32>
    %cst_17 = arith.constant 3.000000e+00 : f32
    %68 = vector.broadcast %cst_17 : f32 to vector<1x256xf32>
    %69 = arith.mulf %68, %57 : vector<1x256xf32>
    %70 = arith.mulf %69, %57 : vector<1x256xf32>
    %cst_18 = arith.constant 1.000000e+00 : f32
    %71 = vector.broadcast %cst_18 : f32 to vector<1x256xf32>
    %72 = arith.mulf %71, %58 : vector<1x256xf32>
    %73 = arith.subf %70, %72 : vector<1x256xf32>
    %cst_19 = arith.constant 5.000000e-01 : f32
    %74 = vector.broadcast %cst_19 : f32 to vector<1x256xf32>
    %75 = arith.mulf %73, %74 : vector<1x256xf32>
    %c0_20 = arith.constant 0 : index
    %c6 = arith.constant 6 : index
    %76 = vector.load %arg2[%c0_20, %c6] : memref<24x7xf32, #tpu.memory_space<vmem>>, vector<24x1xf32>
    %77 = vector.broadcast %76 : vector<24x1xf32> to vector<24x256xf32>
    %78 = vector.broadcast %75 : vector<1x256xf32> to vector<24x256xf32>
    %79 = arith.mulf %77, %78 : vector<24x256xf32>
    %80 = arith.addf %67, %79 : vector<24x256xf32>
    %81 = vector.broadcast %22 : vector<1x256xf32> to vector<24x256xf32>
    %82 = arith.mulf %81, %56 : vector<24x256xf32>
    %83 = arith.mulf %82, %80 : vector<24x256xf32>
    %c0_21 = arith.constant 0 : index
    %c0_22 = arith.constant 0 : index
    %84 = vector.load %arg3[%c0_21, %c0_22] : memref<24x256xf32, #tpu.memory_space<vmem>>, vector<24x256xf32>
    tpu.vector_store %arg3[%c0_21, %c0_22], %83 {strides = array<i32>} : memref<24x256xf32, #tpu.memory_space<vmem>>, vector<24x256xf32>,
    return
  }
  func.func @transform_0(%arg0: i32) -> (i32, i32) {
    %c0_i32 = arith.constant 0 : i32
    %c0_i32_0 = arith.constant 0 : i32
    return %c0_i32, %arg0 : i32, i32
  }
  func.func @transform_1(%arg0: i32) -> (i32, i32) {
    %c0_i32 = arith.constant 0 : i32
    %c0_i32_0 = arith.constant 0 : i32
    %c0_i32_1 = arith.constant 0 : i32
    return %c0_i32, %c0_i32_0 : i32, i32
  }
  func.func @transform_2(%arg0: i32) -> (i32, i32) {
    %c0_i32 = arith.constant 0 : i32
    %c0_i32_0 = arith.constant 0 : i32
    return %c0_i32, %arg0 : i32, i32
  }
}

</mosaic_0001>

<llo_original>
// kernel: _forward.1
$region0: #{_forward.1}
  #allocation0 [shape = 'u32[]', space=smem, size = 0x4, offset = 0x4, fixed_abs, tag = 'smem constant byte address 0x4 - core index']
  #allocation1 [shape = 'u32[144,128]{1,0:T(1,128)}', space=vmem, size = 0x12000, scoped, tag = 'internal scratch']
  %s0 = inlined_call_operand.vmem [shape: f32[2,256], index: 0, kind: input, shape index: {}]
  %s1 = inlined_call_operand.vmem [shape: f32[24,7], index: 1, kind: input, shape index: {}]
  %s2 = inlined_call_operand.vmem [shape: f32[24,256], index: 2, kind: output, shape index: {}]
  %s3 = sld [smem:[#allocation0]]
  $region18: #{_forward.1} parent=0
    _
  %s5 = ssub.s32 1, %s3
  %s6 = scalar_select 0, %s5, %s3
  // Predicated region
  $region2: #{_forward.1} parent=0 // pred_check
    _
  $region3: #{_forward.1} parent=0 // pred_check_branch
    %8 = sbr.rel (0) target = $region5
  $region4: #{_forward.1} parent=0 // pred_region
    _
  $region5: #{_forward.1} parent=0 // pred_fallthru
    _
  // Predicated region
  $region6: #{_forward.1} parent=0 // pred_check
    _
  $region7: #{_forward.1} parent=0 // pred_check_branch
    %10 = sbr.rel (0) target = $region9
  $region8: #{_forward.1} parent=0 // pred_region
    _
  $region9: #{_forward.1} parent=0 // pred_fallthru
    _
  %v11 = vld [vmem:[%s0] ss:$2 sm:$0x3]
  %v12 = vmul.f32 %v11, 0.2
  %s13 = scalar_lea.vmem %s0, 1
  %v14 = vld [vmem:[%s13] ss:$2 sm:$0x3]
  %v15 = vrcp.pop %v12
  %v16 = vmul.f32 %v12, %v15
  %v17 = vsub.f32 2.0, %v16
  %v18 = vmul.f32 %v15, %v17
  %v19 = vmul.f32 %v12, %v12
  %v20 = vmul.f32 %v19, %v19
  %v21 = vmul.f32 %v12, %v20
  %v22 = vmul.f32 %v21, %v12
  %v23 = vmul.f32 %v22, %v12
  %v24 = vmul.f32 %v21, -28.0
  %v25 = vadd.f32 %v18, %v24
  %v26 = vmul.f32 %v22, 48.0
  %v27 = vadd.f32 %v25, %v26
  %v28 = vmul.f32 %v23, -21.0
  %v29 = vadd.f32 %v27, %v28
  %v30 = vld [vmem:[%s1] sm:$0xff]
  %v31 = vld [vmem:[%s1 + $0x8] sm:$0xff]
  %v32 = vld [vmem:[%s1 + $0x10] sm:$0xff]
  %34 = vset.pattern.permute.xlu0 0
  %35 = vperm.xlu0 %34, %v30
  %v36 = vpop.permute.xlu0 %35
  %39 = vset.pattern.permute.xlu0 0
  %40 = vperm.xlu0 %39, %v31
  %v41 = vpop.permute.xlu0 %40
  %44 = vset.pattern.permute.xlu0 0
  %45 = vperm.xlu0 %44, %v32
  %v46 = vpop.permute.xlu0 %45
  %v49 = vlaneseq
  %v50 = vshrl.u32 %v49, 7
  %v51 = vsub.s32 0, %v50
  %v52 = vrot.slane %v12, %v51
  %v53 = vlaneseq
  %v54 = vshrl.u32 %v53, 7
  %v55 = vsub.s32 1, %v54
  %v56 = vrot.slane %v12, %v55
  %v59 = vmul.f32 %v36, %v52
  %v60 = vmul.f32 %v36, %v56
  %v61 = vmul.f32 %v41, %v52
  %v62 = vmul.f32 %v41, %v56
  %v63 = vmul.f32 %v46, %v52
  %v64 = vmul.f32 %v46, %v56
  %v65 = vrcp.pop %v59
  %v66 = vrcp.pop %v60
  %v67 = vrcp.pop %v61
  %v68 = vrcp.pop %v62
  %v69 = vrcp.pop %v63
  %v70 = vrcp.pop %v64
  %v71 = vmul.f32 %v59, %v65
  %v72 = vmul.f32 %v60, %v66
  %v73 = vmul.f32 %v61, %v67
  %v74 = vmul.f32 %v62, %v68
  %v75 = vmul.f32 %v63, %v69
  %v76 = vmul.f32 %v64, %v70
  %v77 = vsub.f32 2.0, %v71
  %v78 = vsub.f32 2.0, %v72
  %v79 = vsub.f32 2.0, %v73
  %v80 = vsub.f32 2.0, %v74
  %v81 = vsub.f32 2.0, %v75
  %v82 = vsub.f32 2.0, %v76
  %v83 = vmul.f32 %v65, %v77
  %v84 = vmul.f32 %v66, %v78
  %v85 = vmul.f32 %v67, %v79
  %v86 = vmul.f32 %v68, %v80
  %v87 = vmul.f32 %v69, %v81
  %v88 = vmul.f32 %v70, %v82
  %v89 = vand.u32 2147483647, %v59
  %vm90 = vcmp.le.f32.partialorder %v89, 0.7853982
  %vm91 = vcmp.lt.s32.totalorder %v59, 0
  %v92 = vand.u32 %v59, 2139095040
  %v93 = vshrl.u32 %v92, 23
  %v94 = vsub.s32 %v93, 127
  %v95 = vand.u32 2147483647, %v59
  %v96 = vand.u32 %v95, 8388607
  %v97 = vor.u32 %v96, 8388608
  %v98 = vsub.s32 0, %v97
  %v99 = vadd.s32 %v94, 1
  %vm100 = vcmp.gt.s32.totalorder %v99, 0
  %v101 = vsel %vm100, %v99, 0
  %v102 = vshrl.u32 %v101, 5
  %v103 = vand.u32 %v101, 31
  %v104 = vsub.s32 32, %v103
  %v105 = vshrl.u32 683565275, %v104
  %v106 = vshll.u32 683565275, %v103
  %v107 = vshrl.u32 2475754826, %v104
  %v108 = vor.u32 %v106, %v107
  %v109 = vshll.u32 2475754826, %v103
  %v110 = vshrl.u32 2131351028, %v104
  %v111 = vor.u32 %v109, %v110
  %v112 = vshll.u32 2131351028, %v103
  %v113 = vshrl.u32 2102212464, %v104
  %v114 = vor.u32 %v112, %v113
  %v115 = vshll.u32 2102212464, %v103
  %v116 = vshrl.u32 920167782, %v104
  %v117 = vor.u32 %v115, %v116
  %v118 = vshll.u32 920167782, %v103
  %v119 = vshrl.u32 1326507024, %v104
  %v120 = vor.u32 %v118, %v119
  %vm121 = vcmp.lt.s32.totalorder %v102, 1
  %vm122 = vcmp.lt.s32.totalorder %v102, 2
  %vm123 = vcmp.lt.s32.totalorder %v102, 3
  %vm124 = vcmp.lt.s32.totalorder %v102, 4
  %v125 = vsel %vm121, %v105, %v108
  %v126 = vsel %vm124, %v114, 2102212464
  %v127 = vsel %vm123, %v111, %v126
  %v128 = vsel %vm122, %v125, %v127
  %v129 = vsel %vm121, %v108, %v111
  %v130 = vsel %vm124, %v117, 920167782
  %v131 = vsel %vm123, %v114, %v130
  %v132 = vsel %vm122, %v129, %v131
  %v133 = vsel %vm121, %v111, %v114
  %v134 = vsel %vm124, %v120, 1326507024
  %v135 = vsel %vm123, %v117, %v134
  %v136 = vsel %vm122, %v133, %v135
  %v137 = vshll.u32 %v97, 8
  %v138 = vmul.u32.u64.compose %v137, %v136
  %v139 = vextract.low.u32 %v138
  %v140 = vextract.high.u32 %v138
  %v141 = vmul.u32.u64.compose %v137, %v132
  %v142 = vextract.low.u32 %v141
  %v143 = vextract.high.u32 %v141
  %v144 = vmul.u32 %v137, %v128
  %v145 = vadd.s32 %v140, %v142
  %vm146 = vc.u32 %v140, %v142
  %v147 = vadd.s32 %v143, 1
  %v148 = vsel %vm146, %v147, %v143
  %v149 = vadd.s32 %v144, %v148
  %v150 = vadd.s32 %v149, 536870912
  %v151 = vshrl.u32 %v150, 30
  %v152 = vshll.u32 %v151, 30
  %v153 = vsub.s32 %v149, %v152
  %vm154 = vcmp.lt.s32.totalorder %v153, 0
  %v155 = vsub.s32 0, %v153
  %v156 = vsel %vm154, %v155, %v153
  %v157 = vclz %v156
  %v158 = vsub.s32 %v157, 2
  %vm159 = vcmp.gt.s32.totalorder 0, %v158
  %v160 = vsel %vm159, 0, %v158
  %v161 = vsub.s32 32, %v160
  %v162 = vshll.u32 %v153, %v160
  %v163 = vshrl.u32 %v145, %v161
  %v164 = vor.u32 %v162, %v163
  %v165 = vsub.s32 4294967266, %v160
  %v166 = vadd.s32 %v165, 127
  %v167 = vshll.u32 %v166, 23
  %v168 = vor.u32 4788187, %v167
  %v169 = vand.u32 2147483647, %v168
  %v171 = vcvt.s32.f32 %v164
  %v172 = vmul.f32 %v171, %v169
  %v173 = vxor.u32 %v172, 2147483648
  %v174 = vsel %vm91, %v173, %v172
  %v175 = vsub.s32 4, %v151
  %v176 = vsel %vm91, %v175, %v151
  %v177 = vsel %vm90, %v59, %v174
  %v178 = vsel %vm90, 0, %v176
  %v179 = vcosq.f32.pop %v177
  %v180 = vsinq.f32.pop %v177
  %vm181 = vweird.f32 %v59
  %v182 = vadd.s32 %v178, 3
  %v183 = vand.u32 %v182, 3
  %vm184 = vcmp.lt.s32.totalorder %v183, 2
  %vm185 = vcmp.eq.s32.totalorder %v183, 0
  %v186 = vxor.u32 %v180, 2147483648
  %v187 = vsel %vm185, %v179, %v186
  %vm188 = vcmp.eq.s32.totalorder %v183, 2
  %v189 = vxor.u32 %v179, 2147483648
  %v190 = vsel %vm188, %v189, %v180
  %v191 = vsel %vm184, %v187, %v190
  %v192 = vsel %vm181, nan, %v191
  %v193 = vand.u32 2147483647, %v60
  %vm194 = vcmp.le.f32.partialorder %v193, 0.7853982
  %vm195 = vcmp.lt.s32.totalorder %v60, 0
  %v196 = vand.u32 %v60, 2139095040
  %v197 = vshrl.u32 %v196, 23
  %v198 = vsub.s32 %v197, 127
  %v199 = vand.u32 2147483647, %v60
  %v200 = vand.u32 %v199, 8388607
  %v201 = vor.u32 %v200, 8388608
  %v202 = vsub.s32 0, %v201
  %v203 = vadd.s32 %v198, 1
  %vm204 = vcmp.gt.s32.totalorder %v203, 0
  %v205 = vsel %vm204, %v203, 0
  %v206 = vshrl.u32 %v205, 5
  %v207 = vand.u32 %v205, 31
  %v208 = vsub.s32 32, %v207
  %v209 = vshrl.u32 683565275, %v208
  %v210 = vshll.u32 683565275, %v207
  %v211 = vshrl.u32 2475754826, %v208
  %v212 = vor.u32 %v210, %v211
  %v213 = vshll.u32 2475754826, %v207
  %v214 = vshrl.u32 2131351028, %v208
  %v215 = vor.u32 %v213, %v214
  %v216 = vshll.u32 2131351028, %v207
  %v217 = vshrl.u32 2102212464, %v208
  %v218 = vor.u32 %v216, %v217
  %v219 = vshll.u32 2102212464, %v207
  %v220 = vshrl.u32 920167782, %v208
  %v221 = vor.u32 %v219, %v220
  %v222 = vshll.u32 920167782, %v207
  %v223 = vshrl.u32 1326507024, %v208
  %v224 = vor.u32 %v222, %v223
  %vm225 = vcmp.lt.s32.totalorder %v206, 1
  %vm226 = vcmp.lt.s32.totalorder %v206, 2
  %vm227 = vcmp.lt.s32.totalorder %v206, 3
  %vm228 = vcmp.lt.s32.totalorder %v206, 4
  %v229 = vsel %vm225, %v209, %v212
  %v230 = vsel %vm228, %v218, 2102212464
  %v231 = vsel %vm227, %v215, %v230
  %v232 = vsel %vm226, %v229, %v231
  %v233 = vsel %vm225, %v212, %v215
  %v234 = vsel %vm228, %v221, 920167782
  %v235 = vsel %vm227, %v218, %v234
  %v236 = vsel %vm226, %v233, %v235
  %v237 = vsel %vm225, %v215, %v218
  %v238 = vsel %vm228, %v224, 1326507024
  %v239 = vsel %vm227, %v221, %v238
  %v240 = vsel %vm226, %v237, %v239
  %v241 = vshll.u32 %v201, 8
  %v242 = vmul.u32.u64.compose %v241, %v240
  %v243 = vextract.low.u32 %v242
  %v244 = vextract.high.u32 %v242
  %v245 = vmul.u32.u64.compose %v241, %v236
  %v246 = vextract.low.u32 %v245
  %v247 = vextract.high.u32 %v245
  %v248 = vmul.u32 %v241, %v232
  %v249 = vadd.s32 %v244, %v246
  %vm250 = vc.u32 %v244, %v246
  %v251 = vadd.s32 %v247, 1
  %v252 = vsel %vm250, %v251, %v247
  %v253 = vadd.s32 %v248, %v252
  %v254 = vadd.s32 %v253, 536870912
  %v255 = vshrl.u32 %v254, 30
  %v256 = vshll.u32 %v255, 30
  %v257 = vsub.s32 %v253, %v256
  %vm258 = vcmp.lt.s32.totalorder %v257, 0
  %v259 = vsub.s32 0, %v257
  %v260 = vsel %vm258, %v259, %v257
  %v261 = vclz %v260
  %v262 = vsub.s32 %v261, 2
  %vm263 = vcmp.gt.s32.totalorder 0, %v262
  %v264 = vsel %vm263, 0, %v262
  %v265 = vsub.s32 32, %v264
  %v266 = vshll.u32 %v257, %v264
  %v267 = vshrl.u32 %v249, %v265
  %v268 = vor.u32 %v266, %v267
  %v269 = vsub.s32 4294967266, %v264
  %v270 = vadd.s32 %v269, 127
  %v271 = vshll.u32 %v270, 23
  %v272 = vor.u32 4788187, %v271
  %v273 = vand.u32 2147483647, %v272
  %v275 = vcvt.s32.f32 %v268
  %v276 = vmul.f32 %v275, %v273
  %v277 = vxor.u32 %v276, 2147483648
  %v278 = vsel %vm195, %v277, %v276
  %v279 = vsub.s32 4, %v255
  %v280 = vsel %vm195, %v279, %v255
  %v281 = vsel %vm194, %v60, %v278
  %v282 = vsel %vm194, 0, %v280
  %v283 = vcosq.f32.pop %v281
  %v284 = vsinq.f32.pop %v281
  %vm285 = vweird.f32 %v60
  %v286 = vadd.s32 %v282, 3
  %v287 = vand.u32 %v286, 3
  %vm288 = vcmp.lt.s32.totalorder %v287, 2
  %vm289 = vcmp.eq.s32.totalorder %v287, 0
  %v290 = vxor.u32 %v284, 2147483648
  %v291 = vsel %vm289, %v283, %v290
  %vm292 = vcmp.eq.s32.totalorder %v287, 2
  %v293 = vxor.u32 %v283, 2147483648
  %v294 = vsel %vm292, %v293, %v284
  %v295 = vsel %vm288, %v291, %v294
  %v296 = vsel %vm285, nan, %v295
  %v297 = vand.u32 2147483647, %v61
  %vm298 = vcmp.le.f32.partialorder %v297, 0.7853982
  %vm299 = vcmp.lt.s32.totalorder %v61, 0
  %v300 = vand.u32 %v61, 2139095040
  %v301 = vshrl.u32 %v300, 23
  %v302 = vsub.s32 %v301, 127
  %v303 = vand.u32 2147483647, %v61
  %v304 = vand.u32 %v303, 8388607
  %v305 = vor.u32 %v304, 8388608
  %v306 = vsub.s32 0, %v305
  %v307 = vadd.s32 %v302, 1
  %vm308 = vcmp.gt.s32.totalorder %v307, 0
  %v309 = vsel %vm308, %v307, 0
  %v310 = vshrl.u32 %v309, 5
  %v311 = vand.u32 %v309, 31
  %v312 = vsub.s32 32, %v311
  %v313 = vshrl.u32 683565275, %v312
  %v314 = vshll.u32 683565275, %v311
  %v315 = vshrl.u32 2475754826, %v312
  %v316 = vor.u32 %v314, %v315
  %v317 = vshll.u32 2475754826, %v311
  %v318 = vshrl.u32 2131351028, %v312
  %v319 = vor.u32 %v317, %v318
  %v320 = vshll.u32 2131351028, %v311
  %v321 = vshrl.u32 2102212464, %v312
  %v322 = vor.u32 %v320, %v321
  %v323 = vshll.u32 2102212464, %v311
  %v324 = vshrl.u32 920167782, %v312
  %v325 = vor.u32 %v323, %v324
  %v326 = vshll.u32 920167782, %v311
  %v327 = vshrl.u32 1326507024, %v312
  %v328 = vor.u32 %v326, %v327
  %vm329 = vcmp.lt.s32.totalorder %v310, 1
  %vm330 = vcmp.lt.s32.totalorder %v310, 2
  %vm331 = vcmp.lt.s32.totalorder %v310, 3
  %vm332 = vcmp.lt.s32.totalorder %v310, 4
  %v333 = vsel %vm329, %v313, %v316
  %v334 = vsel %vm332, %v322, 2102212464
  %v335 = vsel %vm331, %v319, %v334
  %v336 = vsel %vm330, %v333, %v335
  %v337 = vsel %vm329, %v316, %v319
  %v338 = vsel %vm332, %v325, 920167782
  %v339 = vsel %vm331, %v322, %v338
  %v340 = vsel %vm330, %v337, %v339
  %v341 = vsel %vm329, %v319, %v322
  %v342 = vsel %vm332, %v328, 1326507024
  %v343 = vsel %vm331, %v325, %v342
  %v344 = vsel %vm330, %v341, %v343
  %v345 = vshll.u32 %v305, 8
  %v346 = vmul.u32.u64.compose %v345, %v344
  %v347 = vextract.low.u32 %v346
  %v348 = vextract.high.u32 %v346
  %v349 = vmul.u32.u64.compose %v345, %v340
  %v350 = vextract.low.u32 %v349
  %v351 = vextract.high.u32 %v349
  %v352 = vmul.u32 %v345, %v336
  %v353 = vadd.s32 %v348, %v350
  %vm354 = vc.u32 %v348, %v350
  %v355 = vadd.s32 %v351, 1
  %v356 = vsel %vm354, %v355, %v351
  %v357 = vadd.s32 %v352, %v356
  %v358 = vadd.s32 %v357, 536870912
  %v359 = vshrl.u32 %v358, 30
  %v360 = vshll.u32 %v359, 30
  %v361 = vsub.s32 %v357, %v360
  %vm362 = vcmp.lt.s32.totalorder %v361, 0
  %v363 = vsub.s32 0, %v361
  %v364 = vsel %vm362, %v363, %v361
  %v365 = vclz %v364
  %v366 = vsub.s32 %v365, 2
  %vm367 = vcmp.gt.s32.totalorder 0, %v366
  %v368 = vsel %vm367, 0, %v366
  %v369 = vsub.s32 32, %v368
  %v370 = vshll.u32 %v361, %v368
  %v371 = vshrl.u32 %v353, %v369
  %v372 = vor.u32 %v370, %v371
  %v373 = vsub.s32 4294967266, %v368
  %v374 = vadd.s32 %v373, 127
  %v375 = vshll.u32 %v374, 23
  %v376 = vor.u32 4788187, %v375
  %v377 = vand.u32 2147483647, %v376
  %v379 = vcvt.s32.f32 %v372
  %v380 = vmul.f32 %v379, %v377
  %v381 = vxor.u32 %v380, 2147483648
  %v382 = vsel %vm299, %v381, %v380
  %v383 = vsub.s32 4, %v359
  %v384 = vsel %vm299, %v383, %v359
  %v385 = vsel %vm298, %v61, %v382
  %v386 = vsel %vm298, 0, %v384
  %v387 = vcosq.f32.pop %v385
  %v388 = vsinq.f32.pop %v385
  %vm389 = vweird.f32 %v61
  %v390 = vadd.s32 %v386, 3
  %v391 = vand.u32 %v390, 3
  %vm392 = vcmp.lt.s32.totalorder %v391, 2
  %vm393 = vcmp.eq.s32.totalorder %v391, 0
  %v394 = vxor.u32 %v388, 2147483648
  %v395 = vsel %vm393, %v387, %v394
  %vm396 = vcmp.eq.s32.totalorder %v391, 2
  %v397 = vxor.u32 %v387, 2147483648
  %v398 = vsel %vm396, %v397, %v388
  %v399 = vsel %vm392, %v395, %v398
  %v400 = vsel %vm389, nan, %v399
  %v401 = vand.u32 2147483647, %v62
  %vm402 = vcmp.le.f32.partialorder %v401, 0.7853982
  %vm403 = vcmp.lt.s32.totalorder %v62, 0
  %v404 = vand.u32 %v62, 2139095040
  %v405 = vshrl.u32 %v404, 23
  %v406 = vsub.s32 %v405, 127
  %v407 = vand.u32 2147483647, %v62
  %v408 = vand.u32 %v407, 8388607
  %v409 = vor.u32 %v408, 8388608
  %v410 = vsub.s32 0, %v409
  %v411 = vadd.s32 %v406, 1
  %vm412 = vcmp.gt.s32.totalorder %v411, 0
  %v413 = vsel %vm412, %v411, 0
  %v414 = vshrl.u32 %v413, 5
  %v415 = vand.u32 %v413, 31
  %v416 = vsub.s32 32, %v415
  %v417 = vshrl.u32 683565275, %v416
  %v418 = vshll.u32 683565275, %v415
  %v419 = vshrl.u32 2475754826, %v416
  %v420 = vor.u32 %v418, %v419
  %v421 = vshll.u32 2475754826, %v415
  %v422 = vshrl.u32 2131351028, %v416
  %v423 = vor.u32 %v421, %v422
  %v424 = vshll.u32 2131351028, %v415
  %v425 = vshrl.u32 2102212464, %v416
  %v426 = vor.u32 %v424, %v425
  %v427 = vshll.u32 2102212464, %v415
  %v428 = vshrl.u32 920167782, %v416
  %v429 = vor.u32 %v427, %v428
  %v430 = vshll.u32 920167782, %v415
  %v431 = vshrl.u32 1326507024, %v416
  %v432 = vor.u32 %v430, %v431
  %vm433 = vcmp.lt.s32.totalorder %v414, 1
  %vm434 = vcmp.lt.s32.totalorder %v414, 2
  %vm435 = vcmp.lt.s32.totalorder %v414, 3
  %vm436 = vcmp.lt.s32.totalorder %v414, 4
  %v437 = vsel %vm433, %v417, %v420
  %v438 = vsel %vm436, %v426, 2102212464
  %v439 = vsel %vm435, %v423, %v438
  %v440 = vsel %vm434, %v437, %v439
  %v441 = vsel %vm433, %v420, %v423
  %v442 = vsel %vm436, %v429, 920167782
  %v443 = vsel %vm435, %v426, %v442
  %v444 = vsel %vm434, %v441, %v443
  %v445 = vsel %vm433, %v423, %v426
  %v446 = vsel %vm436, %v432, 1326507024
  %v447 = vsel %vm435, %v429, %v446
  %v448 = vsel %vm434, %v445, %v447
  %v449 = vshll.u32 %v409, 8
  %v450 = vmul.u32.u64.compose %v449, %v448
  %v451 = vextract.low.u32 %v450
  %v452 = vextract.high.u32 %v450
  %v453 = vmul.u32.u64.compose %v449, %v444
  %v454 = vextract.low.u32 %v453
  %v455 = vextract.high.u32 %v453
  %v456 = vmul.u32 %v449, %v440
  %v457 = vadd.s32 %v452, %v454
  %vm458 = vc.u32 %v452, %v454
  %v459 = vadd.s32 %v455, 1
  %v460 = vsel %vm458, %v459, %v455
  %v461 = vadd.s32 %v456, %v460
  %v462 = vadd.s32 %v461, 536870912
  %v463 = vshrl.u32 %v462, 30
  %v464 = vshll.u32 %v463, 30
  %v465 = vsub.s32 %v461, %v464
  %vm466 = vcmp.lt.s32.totalorder %v465, 0
  %v467 = vsub.s32 0, %v465
  %v468 = vsel %vm466, %v467, %v465
  %v469 = vclz %v468
  %v470 = vsub.s32 %v469, 2
  %vm471 = vcmp.gt.s32.totalorder 0, %v470
  %v472 = vsel %vm471, 0, %v470
  %v473 = vsub.s32 32, %v472
  %v474 = vshll.u32 %v465, %v472
  %v475 = vshrl.u32 %v457, %v473
  %v476 = vor.u32 %v474, %v475
  %v477 = vsub.s32 4294967266, %v472
  %v478 = vadd.s32 %v477, 127
  %v479 = vshll.u32 %v478, 23
  %v480 = vor.u32 4788187, %v479
  %v481 = vand.u32 2147483647, %v480
  %v483 = vcvt.s32.f32 %v476
  %v484 = vmul.f32 %v483, %v481
  %v485 = vxor.u32 %v484, 2147483648
  %v486 = vsel %vm403, %v485, %v484
  %v487 = vsub.s32 4, %v463
  %v488 = vsel %vm403, %v487, %v463
  %v489 = vsel %vm402, %v62, %v486
  %v490 = vsel %vm402, 0, %v488
  %v491 = vcosq.f32.pop %v489
  %v492 = vsinq.f32.pop %v489
  %vm493 = vweird.f32 %v62
  %v494 = vadd.s32 %v490, 3
  %v495 = vand.u32 %v494, 3
  %vm496 = vcmp.lt.s32.totalorder %v495, 2
  %vm497 = vcmp.eq.s32.totalorder %v495, 0
  %v498 = vxor.u32 %v492, 2147483648
  %v499 = vsel %vm497, %v491, %v498
  %vm500 = vcmp.eq.s32.totalorder %v495, 2
  %v501 = vxor.u32 %v491, 2147483648
  %v502 = vsel %vm500, %v501, %v492
  %v503 = vsel %vm496, %v499, %v502
  %v504 = vsel %vm493, nan, %v503
  %v505 = vand.u32 2147483647, %v63
  %vm506 = vcmp.le.f32.partialorder %v505, 0.7853982
  %vm507 = vcmp.lt.s32.totalorder %v63, 0
  %v508 = vand.u32 %v63, 2139095040
  %v509 = vshrl.u32 %v508, 23
  %v510 = vsub.s32 %v509, 127
  %v511 = vand.u32 2147483647, %v63
  %v512 = vand.u32 %v511, 8388607
  %v513 = vor.u32 %v512, 8388608
  %v514 = vsub.s32 0, %v513
  %v515 = vadd.s32 %v510, 1
  %vm516 = vcmp.gt.s32.totalorder %v515, 0
  %v517 = vsel %vm516, %v515, 0
  %v518 = vshrl.u32 %v517, 5
  %v519 = vand.u32 %v517, 31
  %v520 = vsub.s32 32, %v519
  %v521 = vshrl.u32 683565275, %v520
  %v522 = vshll.u32 683565275, %v519
  %v523 = vshrl.u32 2475754826, %v520
  %v524 = vor.u32 %v522, %v523
  %v525 = vshll.u32 2475754826, %v519
  %v526 = vshrl.u32 2131351028, %v520
  %v527 = vor.u32 %v525, %v526
  %v528 = vshll.u32 2131351028, %v519
  %v529 = vshrl.u32 2102212464, %v520
  %v530 = vor.u32 %v528, %v529
  %v531 = vshll.u32 2102212464, %v519
  %v532 = vshrl.u32 920167782, %v520
  %v533 = vor.u32 %v531, %v532
  %v534 = vshll.u32 920167782, %v519
  %v535 = vshrl.u32 1326507024, %v520
  %v536 = vor.u32 %v534, %v535
  %vm537 = vcmp.lt.s32.totalorder %v518, 1
  %vm538 = vcmp.lt.s32.totalorder %v518, 2
  %vm539 = vcmp.lt.s32.totalorder %v518, 3
  %vm540 = vcmp.lt.s32.totalorder %v518, 4
  %v541 = vsel %vm537, %v521, %v524
  %v542 = vsel %vm540, %v530, 2102212464
  %v543 = vsel %vm539, %v527, %v542
  %v544 = vsel %vm538, %v541, %v543
  %v545 = vsel %vm537, %v524, %v527
  %v546 = vsel %vm540, %v533, 920167782
  %v547 = vsel %vm539, %v530, %v546
  %v548 = vsel %vm538, %v545, %v547
  %v549 = vsel %vm537, %v527, %v530
  %v550 = vsel %vm540, %v536, 1326507024
  %v551 = vsel %vm539, %v533, %v550
  %v552 = vsel %vm538, %v549, %v551
  %v553 = vshll.u32 %v513, 8
  %v554 = vmul.u32.u64.compose %v553, %v552
  %v555 = vextract.low.u32 %v554
  %v556 = vextract.high.u32 %v554
  %v557 = vmul.u32.u64.compose %v553, %v548
  %v558 = vextract.low.u32 %v557
  %v559 = vextract.high.u32 %v557
  %v560 = vmul.u32 %v553, %v544
  %v561 = vadd.s32 %v556, %v558
  %vm562 = vc.u32 %v556, %v558
  %v563 = vadd.s32 %v559, 1
  %v564 = vsel %vm562, %v563, %v559
  %v565 = vadd.s32 %v560, %v564
  %v566 = vadd.s32 %v565, 536870912
  %v567 = vshrl.u32 %v566, 30
  %v568 = vshll.u32 %v567, 30
  %v569 = vsub.s32 %v565, %v568
  %vm570 = vcmp.lt.s32.totalorder %v569, 0
  %v571 = vsub.s32 0, %v569
  %v572 = vsel %vm570, %v571, %v569
  %v573 = vclz %v572
  %v574 = vsub.s32 %v573, 2
  %vm575 = vcmp.gt.s32.totalorder 0, %v574
  %v576 = vsel %vm575, 0, %v574
  %v577 = vsub.s32 32, %v576
  %v578 = vshll.u32 %v569, %v576
  %v579 = vshrl.u32 %v561, %v577
  %v580 = vor.u32 %v578, %v579
  %v581 = vsub.s32 4294967266, %v576
  %v582 = vadd.s32 %v581, 127
  %v583 = vshll.u32 %v582, 23
  %v584 = vor.u32 4788187, %v583
  %v585 = vand.u32 2147483647, %v584
  %v587 = vcvt.s32.f32 %v580
  %v588 = vmul.f32 %v587, %v585
  %v589 = vxor.u32 %v588, 2147483648
  %v590 = vsel %vm507, %v589, %v588
  %v591 = vsub.s32 4, %v567
  %v592 = vsel %vm507, %v591, %v567
  %v593 = vsel %vm506, %v63, %v590
  %v594 = vsel %vm506, 0, %v592
  %v595 = vcosq.f32.pop %v593
  %v596 = vsinq.f32.pop %v593
  %vm597 = vweird.f32 %v63
  %v598 = vadd.s32 %v594, 3
  %v599 = vand.u32 %v598, 3
  %vm600 = vcmp.lt.s32.totalorder %v599, 2
  %vm601 = vcmp.eq.s32.totalorder %v599, 0
  %v602 = vxor.u32 %v596, 2147483648
  %v603 = vsel %vm601, %v595, %v602
  %vm604 = vcmp.eq.s32.totalorder %v599, 2
  %v605 = vxor.u32 %v595, 2147483648
  %v606 = vsel %vm604, %v605, %v596
  %v607 = vsel %vm600, %v603, %v606
  %v608 = vsel %vm597, nan, %v607
  %v609 = vand.u32 2147483647, %v64
  %vm610 = vcmp.le.f32.partialorder %v609, 0.7853982
  %vm611 = vcmp.lt.s32.totalorder %v64, 0
  %v612 = vand.u32 %v64, 2139095040
  %v613 = vshrl.u32 %v612, 23
  %v614 = vsub.s32 %v613, 127
  %v615 = vand.u32 2147483647, %v64
  %v616 = vand.u32 %v615, 8388607
  %v617 = vor.u32 %v616, 8388608
  %v618 = vsub.s32 0, %v617
  %v619 = vadd.s32 %v614, 1
  %vm620 = vcmp.gt.s32.totalorder %v619, 0
  %v621 = vsel %vm620, %v619, 0
  %v622 = vshrl.u32 %v621, 5
  %v623 = vand.u32 %v621, 31
  %v624 = vsub.s32 32, %v623
  %v625 = vshrl.u32 683565275, %v624
  %v626 = vshll.u32 683565275, %v623
  %v627 = vshrl.u32 2475754826, %v624
  %v628 = vor.u32 %v626, %v627
  %v629 = vshll.u32 2475754826, %v623
  %v630 = vshrl.u32 2131351028, %v624
  %v631 = vor.u32 %v629, %v630
  %v632 = vshll.u32 2131351028, %v623
  %v633 = vshrl.u32 2102212464, %v624
  %v634 = vor.u32 %v632, %v633
  %v635 = vshll.u32 2102212464, %v623
  %v636 = vshrl.u32 920167782, %v624
  %v637 = vor.u32 %v635, %v636
  %v638 = vshll.u32 920167782, %v623
  %v639 = vshrl.u32 1326507024, %v624
  %v640 = vor.u32 %v638, %v639
  %vm641 = vcmp.lt.s32.totalorder %v622, 1
  %vm642 = vcmp.lt.s32.totalorder %v622, 2
  %vm643 = vcmp.lt.s32.totalorder %v622, 3
  %vm644 = vcmp.lt.s32.totalorder %v622, 4
  %v645 = vsel %vm641, %v625, %v628
  %v646 = vsel %vm644, %v634, 2102212464
  %v647 = vsel %vm643, %v631, %v646
  %v648 = vsel %vm642, %v645, %v647
  %v649 = vsel %vm641, %v628, %v631
  %v650 = vsel %vm644, %v637, 920167782
  %v651 = vsel %vm643, %v634, %v650
  %v652 = vsel %vm642, %v649, %v651
  %v653 = vsel %vm641, %v631, %v634
  %v654 = vsel %vm644, %v640, 1326507024
  %v655 = vsel %vm643, %v637, %v654
  %v656 = vsel %vm642, %v653, %v655
  %v657 = vshll.u32 %v617, 8
  %v658 = vmul.u32.u64.compose %v657, %v656
  %v659 = vextract.low.u32 %v658
  %v660 = vextract.high.u32 %v658
  %v661 = vmul.u32.u64.compose %v657, %v652
  %v662 = vextract.low.u32 %v661
  %v663 = vextract.high.u32 %v661
  %v664 = vmul.u32 %v657, %v648
  %v665 = vadd.s32 %v660, %v662
  %vm666 = vc.u32 %v660, %v662
  %v667 = vadd.s32 %v663, 1
  %v668 = vsel %vm666, %v667, %v663
  %v669 = vadd.s32 %v664, %v668
  %v670 = vadd.s32 %v669, 536870912
  %v671 = vshrl.u32 %v670, 30
  %v672 = vshll.u32 %v671, 30
  %v673 = vsub.s32 %v669, %v672
  %vm674 = vcmp.lt.s32.totalorder %v673, 0
  %v675 = vsub.s32 0, %v673
  %v676 = vsel %vm674, %v675, %v673
  %v677 = vclz %v676
  %v678 = vsub.s32 %v677, 2
  %vm679 = vcmp.gt.s32.totalorder 0, %v678
  %v680 = vsel %vm679, 0, %v678
  %v681 = vsub.s32 32, %v680
  %v682 = vshll.u32 %v673, %v680
  %v683 = vshrl.u32 %v665, %v681
  %v684 = vor.u32 %v682, %v683
  %v685 = vsub.s32 4294967266, %v680
  %v686 = vadd.s32 %v685, 127
  %v687 = vshll.u32 %v686, 23
  %v688 = vor.u32 4788187, %v687
  %v689 = vand.u32 2147483647, %v688
  %v691 = vcvt.s32.f32 %v684
  %v692 = vmul.f32 %v691, %v689
  %v693 = vxor.u32 %v692, 2147483648
  %v694 = vsel %vm611, %v693, %v692
  %v695 = vsub.s32 4, %v671
  %v696 = vsel %vm611, %v695, %v671
  %v697 = vsel %vm610, %v64, %v694
  %v698 = vsel %vm610, 0, %v696
  %v699 = vcosq.f32.pop %v697
  %v700 = vsinq.f32.pop %v697
  %vm701 = vweird.f32 %v64
  %v702 = vadd.s32 %v698, 3
  %v703 = vand.u32 %v702, 3
  %vm704 = vcmp.lt.s32.totalorder %v703, 2
  %vm705 = vcmp.eq.s32.totalorder %v703, 0
  %v706 = vxor.u32 %v700, 2147483648
  %v707 = vsel %vm705, %v699, %v706
  %vm708 = vcmp.eq.s32.totalorder %v703, 2
  %v709 = vxor.u32 %v699, 2147483648
  %v710 = vsel %vm708, %v709, %v700
  %v711 = vsel %vm704, %v707, %v710
  %v712 = vsel %vm701, nan, %v711
  %v713 = vand.u32 2147483647, %v59
  %vm714 = vcmp.le.f32.partialorder %v713, 0.7853982
  %vm715 = vcmp.lt.s32.totalorder %v59, 0
  %v716 = vand.u32 %v59, 2139095040
  %v717 = vshrl.u32 %v716, 23
  %v718 = vsub.s32 %v717, 127
  %v719 = vand.u32 2147483647, %v59
  %v720 = vand.u32 %v719, 8388607
  %v721 = vor.u32 %v720, 8388608
  %v722 = vsub.s32 0, %v721
  %v723 = vadd.s32 %v718, 1
  %vm724 = vcmp.gt.s32.totalorder %v723, 0
  %v725 = vsel %vm724, %v723, 0
  %v726 = vshrl.u32 %v725, 5
  %v727 = vand.u32 %v725, 31
  %v728 = vsub.s32 32, %v727
  %v729 = vshrl.u32 683565275, %v728
  %v730 = vshll.u32 683565275, %v727
  %v731 = vshrl.u32 2475754826, %v728
  %v732 = vor.u32 %v730, %v731
  %v733 = vshll.u32 2475754826, %v727
  %v734 = vshrl.u32 2131351028, %v728
  %v735 = vor.u32 %v733, %v734
  %v736 = vshll.u32 2131351028, %v727
  %v737 = vshrl.u32 2102212464, %v728
  %v738 = vor.u32 %v736, %v737
  %v739 = vshll.u32 2102212464, %v727
  %v740 = vshrl.u32 920167782, %v728
  %v741 = vor.u32 %v739, %v740
  %v742 = vshll.u32 920167782, %v727
  %v743 = vshrl.u32 1326507024, %v728
  %v744 = vor.u32 %v742, %v743
  %vm745 = vcmp.lt.s32.totalorder %v726, 1
  %vm746 = vcmp.lt.s32.totalorder %v726, 2
  %vm747 = vcmp.lt.s32.totalorder %v726, 3
  %vm748 = vcmp.lt.s32.totalorder %v726, 4
  %v749 = vsel %vm745, %v729, %v732
  %v750 = vsel %vm748, %v738, 2102212464
  %v751 = vsel %vm747, %v735, %v750
  %v752 = vsel %vm746, %v749, %v751
  %v753 = vsel %vm745, %v732, %v735
  %v754 = vsel %vm748, %v741, 920167782
  %v755 = vsel %vm747, %v738, %v754
  %v756 = vsel %vm746, %v753, %v755
  %v757 = vsel %vm745, %v735, %v738
  %v758 = vsel %vm748, %v744, 1326507024
  %v759 = vsel %vm747, %v741, %v758
  %v760 = vsel %vm746, %v757, %v759
  %v761 = vshll.u32 %v721, 8
  %v762 = vmul.u32.u64.compose %v761, %v760
  %v763 = vextract.low.u32 %v762
  %v764 = vextract.high.u32 %v762
  %v765 = vmul.u32.u64.compose %v761, %v756
  %v766 = vextract.low.u32 %v765
  %v767 = vextract.high.u32 %v765
  %v768 = vmul.u32 %v761, %v752
  %v769 = vadd.s32 %v764, %v766
  %vm770 = vc.u32 %v764, %v766
  %v771 = vadd.s32 %v767, 1
  %v772 = vsel %vm770, %v771, %v767
  %v773 = vadd.s32 %v768, %v772
  %v774 = vadd.s32 %v773, 536870912
  %v775 = vshrl.u32 %v774, 30
  %v776 = vshll.u32 %v775, 30
  %v777 = vsub.s32 %v773, %v776
  %vm778 = vcmp.lt.s32.totalorder %v777, 0
  %v779 = vsub.s32 0, %v777
  %v780 = vsel %vm778, %v779, %v777
  %v781 = vclz %v780
  %v782 = vsub.s32 %v781, 2
  %vm783 = vcmp.gt.s32.totalorder 0, %v782
  %v784 = vsel %vm783, 0, %v782
  %v785 = vsub.s32 32, %v784
  %v786 = vshll.u32 %v777, %v784
  %v787 = vshrl.u32 %v769, %v785
  %v788 = vor.u32 %v786, %v787
  %v789 = vsub.s32 4294967266, %v784
  %v790 = vadd.s32 %v789, 127
  %v791 = vshll.u32 %v790, 23
  %v792 = vor.u32 4788187, %v791
  %v793 = vand.u32 2147483647, %v792
  %v795 = vcvt.s32.f32 %v788
  %v796 = vmul.f32 %v795, %v793
  %v797 = vxor.u32 %v796, 2147483648
  %v798 = vsel %vm715, %v797, %v796
  %v799 = vsub.s32 4, %v775
  %v800 = vsel %vm715, %v799, %v775
  %v801 = vsel %vm714, %v59, %v798
  %v802 = vsel %vm714, 0, %v800
  %v803 = vcosq.f32.pop %v801
  %v804 = vsinq.f32.pop %v801
  %vm805 = vweird.f32 %v59
  %v806 = vand.u32 %v802, 3
  %vm807 = vcmp.lt.s32.totalorder %v806, 2
  %vm808 = vcmp.eq.s32.totalorder %v806, 0
  %v809 = vxor.u32 %v804, 2147483648
  %v810 = vsel %vm808, %v803, %v809
  %vm811 = vcmp.eq.s32.totalorder %v806, 2
  %v812 = vxor.u32 %v803, 2147483648
  %v813 = vsel %vm811, %v812, %v804
  %v814 = vsel %vm807, %v810, %v813
  %v815 = vsel %vm805, nan, %v814
  %v816 = vand.u32 2147483647, %v60
  %vm817 = vcmp.le.f32.partialorder %v816, 0.7853982
  %vm818 = vcmp.lt.s32.totalorder %v60, 0
  %v819 = vand.u32 %v60, 2139095040
  %v820 = vshrl.u32 %v819, 23
  %v821 = vsub.s32 %v820, 127
  %v822 = vand.u32 2147483647, %v60
  %v823 = vand.u32 %v822, 8388607
  %v824 = vor.u32 %v823, 8388608
  %v825 = vsub.s32 0, %v824
  %v826 = vadd.s32 %v821, 1
  %vm827 = vcmp.gt.s32.totalorder %v826, 0
  %v828 = vsel %vm827, %v826, 0
  %v829 = vshrl.u32 %v828, 5
  %v830 = vand.u32 %v828, 31
  %v831 = vsub.s32 32, %v830
  %v832 = vshrl.u32 683565275, %v831
  %v833 = vshll.u32 683565275, %v830
  %v834 = vshrl.u32 2475754826, %v831
  %v835 = vor.u32 %v833, %v834
  %v836 = vshll.u32 2475754826, %v830
  %v837 = vshrl.u32 2131351028, %v831
  %v838 = vor.u32 %v836, %v837
  %v839 = vshll.u32 2131351028, %v830
  %v840 = vshrl.u32 2102212464, %v831
  %v841 = vor.u32 %v839, %v840
  %v842 = vshll.u32 2102212464, %v830
  %v843 = vshrl.u32 920167782, %v831
  %v844 = vor.u32 %v842, %v843
  %v845 = vshll.u32 920167782, %v830
  %v846 = vshrl.u32 1326507024, %v831
  %v847 = vor.u32 %v845, %v846
  %vm848 = vcmp.lt.s32.totalorder %v829, 1
  %vm849 = vcmp.lt.s32.totalorder %v829, 2
  %vm850 = vcmp.lt.s32.totalorder %v829, 3
  %vm851 = vcmp.lt.s32.totalorder %v829, 4
  %v852 = vsel %vm848, %v832, %v835
  %v853 = vsel %vm851, %v841, 2102212464
  %v854 = vsel %vm850, %v838, %v853
  %v855 = vsel %vm849, %v852, %v854
  %v856 = vsel %vm848, %v835, %v838
  %v857 = vsel %vm851, %v844, 920167782
  %v858 = vsel %vm850, %v841, %v857
  %v859 = vsel %vm849, %v856, %v858
  %v860 = vsel %vm848, %v838, %v841
  %v861 = vsel %vm851, %v847, 1326507024
  %v862 = vsel %vm850, %v844, %v861
  %v863 = vsel %vm849, %v860, %v862
  %v864 = vshll.u32 %v824, 8
  %v865 = vmul.u32.u64.compose %v864, %v863
  %v866 = vextract.low.u32 %v865
  %v867 = vextract.high.u32 %v865
  %v868 = vmul.u32.u64.compose %v864, %v859
  %v869 = vextract.low.u32 %v868
  %v870 = vextract.high.u32 %v868
  %v871 = vmul.u32 %v864, %v855
  %v872 = vadd.s32 %v867, %v869
  %vm873 = vc.u32 %v867, %v869
  %v874 = vadd.s32 %v870, 1
  %v875 = vsel %vm873, %v874, %v870
  %v876 = vadd.s32 %v871, %v875
  %v877 = vadd.s32 %v876, 536870912
  %v878 = vshrl.u32 %v877, 30
  %v879 = vshll.u32 %v878, 30
  %v880 = vsub.s32 %v876, %v879
  %vm881 = vcmp.lt.s32.totalorder %v880, 0
  %v882 = vsub.s32 0, %v880
  %v883 = vsel %vm881, %v882, %v880
  %v884 = vclz %v883
  %v885 = vsub.s32 %v884, 2
  %vm886 = vcmp.gt.s32.totalorder 0, %v885
  %v887 = vsel %vm886, 0, %v885
  %v888 = vsub.s32 32, %v887
  %v889 = vshll.u32 %v880, %v887
  %v890 = vshrl.u32 %v872, %v888
  %v891 = vor.u32 %v889, %v890
  %v892 = vsub.s32 4294967266, %v887
  %v893 = vadd.s32 %v892, 127
  %v894 = vshll.u32 %v893, 23
  %v895 = vor.u32 4788187, %v894
  %v896 = vand.u32 2147483647, %v895
  %v898 = vcvt.s32.f32 %v891
  %v899 = vmul.f32 %v898, %v896
  %v900 = vxor.u32 %v899, 2147483648
  %v901 = vsel %vm818, %v900, %v899
  %v902 = vsub.s32 4, %v878
  %v903 = vsel %vm818, %v902, %v878
  %v904 = vsel %vm817, %v60, %v901
  %v905 = vsel %vm817, 0, %v903
  %v906 = vcosq.f32.pop %v904
  %v907 = vsinq.f32.pop %v904
  %vm908 = vweird.f32 %v60
  %v909 = vand.u32 %v905, 3
  %vm910 = vcmp.lt.s32.totalorder %v909, 2
  %vm911 = vcmp.eq.s32.totalorder %v909, 0
  %v912 = vxor.u32 %v907, 2147483648
  %v913 = vsel %vm911, %v906, %v912
  %vm914 = vcmp.eq.s32.totalorder %v909, 2
  %v915 = vxor.u32 %v906, 2147483648
  %v916 = vsel %vm914, %v915, %v907
  %v917 = vsel %vm910, %v913, %v916
  %v918 = vsel %vm908, nan, %v917
  %v919 = vand.u32 2147483647, %v61
  %vm920 = vcmp.le.f32.partialorder %v919, 0.7853982
  %vm921 = vcmp.lt.s32.totalorder %v61, 0
  %v922 = vand.u32 %v61, 2139095040
  %v923 = vshrl.u32 %v922, 23
  %v924 = vsub.s32 %v923, 127
  %v925 = vand.u32 2147483647, %v61
  %v926 = vand.u32 %v925, 8388607
  %v927 = vor.u32 %v926, 8388608
  %v928 = vsub.s32 0, %v927
  %v929 = vadd.s32 %v924, 1
  %vm930 = vcmp.gt.s32.totalorder %v929, 0
  %v931 = vsel %vm930, %v929, 0
  %v932 = vshrl.u32 %v931, 5
  %v933 = vand.u32 %v931, 31
  %v934 = vsub.s32 32, %v933
  %v935 = vshrl.u32 683565275, %v934
  %v936 = vshll.u32 683565275, %v933
  %v937 = vshrl.u32 2475754826, %v934
  %v938 = vor.u32 %v936, %v937
  %v939 = vshll.u32 2475754826, %v933
  %v940 = vshrl.u32 2131351028, %v934
  %v941 = vor.u32 %v939, %v940
  %v942 = vshll.u32 2131351028, %v933
  %v943 = vshrl.u32 2102212464, %v934
  %v944 = vor.u32 %v942, %v943
  %v945 = vshll.u32 2102212464, %v933
  %v946 = vshrl.u32 920167782, %v934
  %v947 = vor.u32 %v945, %v946
  %v948 = vshll.u32 920167782, %v933
  %v949 = vshrl.u32 1326507024, %v934
  %v950 = vor.u32 %v948, %v949
  %vm951 = vcmp.lt.s32.totalorder %v932, 1
  %vm952 = vcmp.lt.s32.totalorder %v932, 2
  %vm953 = vcmp.lt.s32.totalorder %v932, 3
  %vm954 = vcmp.lt.s32.totalorder %v932, 4
  %v955 = vsel %vm951, %v935, %v938
  %v956 = vsel %vm954, %v944, 2102212464
  %v957 = vsel %vm953, %v941, %v956
  %v958 = vsel %vm952, %v955, %v957
  %v959 = vsel %vm951, %v938, %v941
  %v960 = vsel %vm954, %v947, 920167782
  %v961 = vsel %vm953, %v944, %v960
  %v962 = vsel %vm952, %v959, %v961
  %v963 = vsel %vm951, %v941, %v944
  %v964 = vsel %vm954, %v950, 1326507024
  %v965 = vsel %vm953, %v947, %v964
  %v966 = vsel %vm952, %v963, %v965
  %v967 = vshll.u32 %v927, 8
  %v968 = vmul.u32.u64.compose %v967, %v966
  %v969 = vextract.low.u32 %v968
  %v970 = vextract.high.u32 %v968
  %v971 = vmul.u32.u64.compose %v967, %v962
  %v972 = vextract.low.u32 %v971
  %v973 = vextract.high.u32 %v971
  %v974 = vmul.u32 %v967, %v958
  %v975 = vadd.s32 %v970, %v972
  %vm976 = vc.u32 %v970, %v972
  %v977 = vadd.s32 %v973, 1
  %v978 = vsel %vm976, %v977, %v973
  %v979 = vadd.s32 %v974, %v978
  %v980 = vadd.s32 %v979, 536870912
  %v981 = vshrl.u32 %v980, 30
  %v982 = vshll.u32 %v981, 30
  %v983 = vsub.s32 %v979, %v982
  %vm984 = vcmp.lt.s32.totalorder %v983, 0
  %v985 = vsub.s32 0, %v983
  %v986 = vsel %vm984, %v985, %v983
  %v987 = vclz %v986
  %v988 = vsub.s32 %v987, 2
  %vm989 = vcmp.gt.s32.totalorder 0, %v988
  %v990 = vsel %vm989, 0, %v988
  %v991 = vsub.s32 32, %v990
  %v992 = vshll.u32 %v983, %v990
  %v993 = vshrl.u32 %v975, %v991
  %v994 = vor.u32 %v992, %v993
  %v995 = vsub.s32 4294967266, %v990
  %v996 = vadd.s32 %v995, 127
  %v997 = vshll.u32 %v996, 23
  %v998 = vor.u32 4788187, %v997
  %v999 = vand.u32 2147483647, %v998
  %v1001 = vcvt.s32.f32 %v994
  %v1002 = vmul.f32 %v1001, %v999
  %v1003 = vxor.u32 %v1002, 2147483648
  %v1004 = vsel %vm921, %v1003, %v1002
  %v1005 = vsub.s32 4, %v981
  %v1006 = vsel %vm921, %v1005, %v981
  %v1007 = vsel %vm920, %v61, %v1004
  %v1008 = vsel %vm920, 0, %v1006
  %v1009 = vcosq.f32.pop %v1007
  %v1010 = vsinq.f32.pop %v1007
  %vm1011 = vweird.f32 %v61
  %v1012 = vand.u32 %v1008, 3
  %vm1013 = vcmp.lt.s32.totalorder %v1012, 2
  %vm1014 = vcmp.eq.s32.totalorder %v1012, 0
  %v1015 = vxor.u32 %v1010, 2147483648
  %v1016 = vsel %vm1014, %v1009, %v1015
  %vm1017 = vcmp.eq.s32.totalorder %v1012, 2
  %v1018 = vxor.u32 %v1009, 2147483648
  %v1019 = vsel %vm1017, %v1018, %v1010
  %v1020 = vsel %vm1013, %v1016, %v1019
  %v1021 = vsel %vm1011, nan, %v1020
  %v1022 = vand.u32 2147483647, %v62
  %vm1023 = vcmp.le.f32.partialorder %v1022, 0.7853982
  %vm1024 = vcmp.lt.s32.totalorder %v62, 0
  %v1025 = vand.u32 %v62, 2139095040
  %v1026 = vshrl.u32 %v1025, 23
  %v1027 = vsub.s32 %v1026, 127
  %v1028 = vand.u32 2147483647, %v62
  %v1029 = vand.u32 %v1028, 8388607
  %v1030 = vor.u32 %v1029, 8388608
  %v1031 = vsub.s32 0, %v1030
  %v1032 = vadd.s32 %v1027, 1
  %vm1033 = vcmp.gt.s32.totalorder %v1032, 0
  %v1034 = vsel %vm1033, %v1032, 0
  %v1035 = vshrl.u32 %v1034, 5
  %v1036 = vand.u32 %v1034, 31
  %v1037 = vsub.s32 32, %v1036
  %v1038 = vshrl.u32 683565275, %v1037
  %v1039 = vshll.u32 683565275, %v1036
  %v1040 = vshrl.u32 2475754826, %v1037
  %v1041 = vor.u32 %v1039, %v1040
  %v1042 = vshll.u32 2475754826, %v1036
  %v1043 = vshrl.u32 2131351028, %v1037
  %v1044 = vor.u32 %v1042, %v1043
  %v1045 = vshll.u32 2131351028, %v1036
  %v1046 = vshrl.u32 2102212464, %v1037
  %v1047 = vor.u32 %v1045, %v1046
  %v1048 = vshll.u32 2102212464, %v1036
  %v1049 = vshrl.u32 920167782, %v1037
  %v1050 = vor.u32 %v1048, %v1049
  %v1051 = vshll.u32 920167782, %v1036
  %v1052 = vshrl.u32 1326507024, %v1037
  %v1053 = vor.u32 %v1051, %v1052
  %vm1054 = vcmp.lt.s32.totalorder %v1035, 1
  %vm1055 = vcmp.lt.s32.totalorder %v1035, 2
  %vm1056 = vcmp.lt.s32.totalorder %v1035, 3
  %vm1057 = vcmp.lt.s32.totalorder %v1035, 4
  %v1058 = vsel %vm1054, %v1038, %v1041
  %v1059 = vsel %vm1057, %v1047, 2102212464
  %v1060 = vsel %vm1056, %v1044, %v1059
  %v1061 = vsel %vm1055, %v1058, %v1060
  %v1062 = vsel %vm1054, %v1041, %v1044
  %v1063 = vsel %vm1057, %v1050, 920167782
  %v1064 = vsel %vm1056, %v1047, %v1063
  %v1065 = vsel %vm1055, %v1062, %v1064
  %v1066 = vsel %vm1054, %v1044, %v1047
  %v1067 = vsel %vm1057, %v1053, 1326507024
  %v1068 = vsel %vm1056, %v1050, %v1067
  %v1069 = vsel %vm1055, %v1066, %v1068
  %v1070 = vshll.u32 %v1030, 8
  %v1071 = vmul.u32.u64.compose %v1070, %v1069
  %v1072 = vextract.low.u32 %v1071
  %v1073 = vextract.high.u32 %v1071
  %v1074 = vmul.u32.u64.compose %v1070, %v1065
  %v1075 = vextract.low.u32 %v1074
  %v1076 = vextract.high.u32 %v1074
  %v1077 = vmul.u32 %v1070, %v1061
  %v1078 = vadd.s32 %v1073, %v1075
  %vm1079 = vc.u32 %v1073, %v1075
  %v1080 = vadd.s32 %v1076, 1
  %v1081 = vsel %vm1079, %v1080, %v1076
  %v1082 = vadd.s32 %v1077, %v1081
  %v1083 = vadd.s32 %v1082, 536870912
  %v1084 = vshrl.u32 %v1083, 30
  %v1085 = vshll.u32 %v1084, 30
  %v1086 = vsub.s32 %v1082, %v1085
  %vm1087 = vcmp.lt.s32.totalorder %v1086, 0
  %v1088 = vsub.s32 0, %v1086
  %v1089 = vsel %vm1087, %v1088, %v1086
  %v1090 = vclz %v1089
  %v1091 = vsub.s32 %v1090, 2
  %vm1092 = vcmp.gt.s32.totalorder 0, %v1091
  %v1093 = vsel %vm1092, 0, %v1091
  %v1094 = vsub.s32 32, %v1093
  %v1095 = vshll.u32 %v1086, %v1093
  %v1096 = vshrl.u32 %v1078, %v1094
  %v1097 = vor.u32 %v1095, %v1096
  %v1098 = vsub.s32 4294967266, %v1093
  %v1099 = vadd.s32 %v1098, 127
  %v1100 = vshll.u32 %v1099, 23
  %v1101 = vor.u32 4788187, %v1100
  %v1102 = vand.u32 2147483647, %v1101
  %v1104 = vcvt.s32.f32 %v1097
  %v1105 = vmul.f32 %v1104, %v1102
  %v1106 = vxor.u32 %v1105, 2147483648
  %v1107 = vsel %vm1024, %v1106, %v1105
  %v1108 = vsub.s32 4, %v1084
  %v1109 = vsel %vm1024, %v1108, %v1084
  %v1110 = vsel %vm1023, %v62, %v1107
  %v1111 = vsel %vm1023, 0, %v1109
  %v1112 = vcosq.f32.pop %v1110
  %v1113 = vsinq.f32.pop %v1110
  %vm1114 = vweird.f32 %v62
  %v1115 = vand.u32 %v1111, 3
  %vm1116 = vcmp.lt.s32.totalorder %v1115, 2
  %vm1117 = vcmp.eq.s32.totalorder %v1115, 0
  %v1118 = vxor.u32 %v1113, 2147483648
  %v1119 = vsel %vm1117, %v1112, %v1118
  %vm1120 = vcmp.eq.s32.totalorder %v1115, 2
  %v1121 = vxor.u32 %v1112, 2147483648
  %v1122 = vsel %vm1120, %v1121, %v1113
  %v1123 = vsel %vm1116, %v1119, %v1122
  %v1124 = vsel %vm1114, nan, %v1123
  %v1125 = vand.u32 2147483647, %v63
  %vm1126 = vcmp.le.f32.partialorder %v1125, 0.7853982
  %vm1127 = vcmp.lt.s32.totalorder %v63, 0
  %v1128 = vand.u32 %v63, 2139095040
  %v1129 = vshrl.u32 %v1128, 23
  %v1130 = vsub.s32 %v1129, 127
  %v1131 = vand.u32 2147483647, %v63
  %v1132 = vand.u32 %v1131, 8388607
  %v1133 = vor.u32 %v1132, 8388608
  %v1134 = vsub.s32 0, %v1133
  %v1135 = vadd.s32 %v1130, 1
  %vm1136 = vcmp.gt.s32.totalorder %v1135, 0
  %v1137 = vsel %vm1136, %v1135, 0
  %v1138 = vshrl.u32 %v1137, 5
  %v1139 = vand.u32 %v1137, 31
  %v1140 = vsub.s32 32, %v1139
  %v1141 = vshrl.u32 683565275, %v1140
  %v1142 = vshll.u32 683565275, %v1139
  %v1143 = vshrl.u32 2475754826, %v1140
  %v1144 = vor.u32 %v1142, %v1143
  %v1145 = vshll.u32 2475754826, %v1139
  %v1146 = vshrl.u32 2131351028, %v1140
  %v1147 = vor.u32 %v1145, %v1146
  %v1148 = vshll.u32 2131351028, %v1139
  %v1149 = vshrl.u32 2102212464, %v1140
  %v1150 = vor.u32 %v1148, %v1149
  %v1151 = vshll.u32 2102212464, %v1139
  %v1152 = vshrl.u32 920167782, %v1140
  %v1153 = vor.u32 %v1151, %v1152
  %v1154 = vshll.u32 920167782, %v1139
  %v1155 = vshrl.u32 1326507024, %v1140
  %v1156 = vor.u32 %v1154, %v1155
  %vm1157 = vcmp.lt.s32.totalorder %v1138, 1
  %vm1158 = vcmp.lt.s32.totalorder %v1138, 2
  %vm1159 = vcmp.lt.s32.totalorder %v1138, 3
  %vm1160 = vcmp.lt.s32.totalorder %v1138, 4
  %v1161 = vsel %vm1157, %v1141, %v1144
  %v1162 = vsel %vm1160, %v1150, 2102212464
  %v1163 = vsel %vm1159, %v1147, %v1162
  %v1164 = vsel %vm1158, %v1161, %v1163
  %v1165 = vsel %vm1157, %v1144, %v1147
  %v1166 = vsel %vm1160, %v1153, 920167782
  %v1167 = vsel %vm1159, %v1150, %v1166
  %v1168 = vsel %vm1158, %v1165, %v1167
  %v1169 = vsel %vm1157, %v1147, %v1150
  %v1170 = vsel %vm1160, %v1156, 1326507024
  %v1171 = vsel %vm1159, %v1153, %v1170
  %v1172 = vsel %vm1158, %v1169, %v1171
  %v1173 = vshll.u32 %v1133, 8
  %v1174 = vmul.u32.u64.compose %v1173, %v1172
  %v1175 = vextract.low.u32 %v1174
  %v1176 = vextract.high.u32 %v1174
  %v1177 = vmul.u32.u64.compose %v1173, %v1168
  %v1178 = vextract.low.u32 %v1177
  %v1179 = vextract.high.u32 %v1177
  %v1180 = vmul.u32 %v1173, %v1164
  %v1181 = vadd.s32 %v1176, %v1178
  %vm1182 = vc.u32 %v1176, %v1178
  %v1183 = vadd.s32 %v1179, 1
  %v1184 = vsel %vm1182, %v1183, %v1179
  %v1185 = vadd.s32 %v1180, %v1184
  %v1186 = vadd.s32 %v1185, 536870912
  %v1187 = vshrl.u32 %v1186, 30
  %v1188 = vshll.u32 %v1187, 30
  %v1189 = vsub.s32 %v1185, %v1188
  %vm1190 = vcmp.lt.s32.totalorder %v1189, 0
  %v1191 = vsub.s32 0, %v1189
  %v1192 = vsel %vm1190, %v1191, %v1189
  %v1193 = vclz %v1192
  %v1194 = vsub.s32 %v1193, 2
  %vm1195 = vcmp.gt.s32.totalorder 0, %v1194
  %v1196 = vsel %vm1195, 0, %v1194
  %v1197 = vsub.s32 32, %v1196
  %v1198 = vshll.u32 %v1189, %v1196
  %v1199 = vshrl.u32 %v1181, %v1197
  %v1200 = vor.u32 %v1198, %v1199
  %v1201 = vsub.s32 4294967266, %v1196
  %v1202 = vadd.s32 %v1201, 127
  %v1203 = vshll.u32 %v1202, 23
  %v1204 = vor.u32 4788187, %v1203
  %v1205 = vand.u32 2147483647, %v1204
  %v1207 = vcvt.s32.f32 %v1200
  %v1208 = vmul.f32 %v1207, %v1205
  %v1209 = vxor.u32 %v1208, 2147483648
  %v1210 = vsel %vm1127, %v1209, %v1208
  %v1211 = vsub.s32 4, %v1187
  %v1212 = vsel %vm1127, %v1211, %v1187
  %v1213 = vsel %vm1126, %v63, %v1210
  %v1214 = vsel %vm1126, 0, %v1212
  %v1215 = vcosq.f32.pop %v1213
  %v1216 = vsinq.f32.pop %v1213
  %vm1217 = vweird.f32 %v63
  %v1218 = vand.u32 %v1214, 3
  %vm1219 = vcmp.lt.s32.totalorder %v1218, 2
  %vm1220 = vcmp.eq.s32.totalorder %v1218, 0
  %v1221 = vxor.u32 %v1216, 2147483648
  %v1222 = vsel %vm1220, %v1215, %v1221
  %vm1223 = vcmp.eq.s32.totalorder %v1218, 2
  %v1224 = vxor.u32 %v1215, 2147483648
  %v1225 = vsel %vm1223, %v1224, %v1216
  %v1226 = vsel %vm1219, %v1222, %v1225
  %v1227 = vsel %vm1217, nan, %v1226
  %v1228 = vand.u32 2147483647, %v64
  %vm1229 = vcmp.le.f32.partialorder %v1228, 0.7853982
  %vm1230 = vcmp.lt.s32.totalorder %v64, 0
  %v1231 = vand.u32 %v64, 2139095040
  %v1232 = vshrl.u32 %v1231, 23
  %v1233 = vsub.s32 %v1232, 127
  %v1234 = vand.u32 2147483647, %v64
  %v1235 = vand.u32 %v1234, 8388607
  %v1236 = vor.u32 %v1235, 8388608
  %v1237 = vsub.s32 0, %v1236
  %v1238 = vadd.s32 %v1233, 1
  %vm1239 = vcmp.gt.s32.totalorder %v1238, 0
  %v1240 = vsel %vm1239, %v1238, 0
  %v1241 = vshrl.u32 %v1240, 5
  %v1242 = vand.u32 %v1240, 31
  %v1243 = vsub.s32 32, %v1242
  %v1244 = vshrl.u32 683565275, %v1243
  %v1245 = vshll.u32 683565275, %v1242
  %v1246 = vshrl.u32 2475754826, %v1243
  %v1247 = vor.u32 %v1245, %v1246
  %v1248 = vshll.u32 2475754826, %v1242
  %v1249 = vshrl.u32 2131351028, %v1243
  %v1250 = vor.u32 %v1248, %v1249
  %v1251 = vshll.u32 2131351028, %v1242
  %v1252 = vshrl.u32 2102212464, %v1243
  %v1253 = vor.u32 %v1251, %v1252
  %v1254 = vshll.u32 2102212464, %v1242
  %v1255 = vshrl.u32 920167782, %v1243
  %v1256 = vor.u32 %v1254, %v1255
  %v1257 = vshll.u32 920167782, %v1242
  %v1258 = vshrl.u32 1326507024, %v1243
  %v1259 = vor.u32 %v1257, %v1258
  %vm1260 = vcmp.lt.s32.totalorder %v1241, 1
  %vm1261 = vcmp.lt.s32.totalorder %v1241, 2
  %vm1262 = vcmp.lt.s32.totalorder %v1241, 3
  %vm1263 = vcmp.lt.s32.totalorder %v1241, 4
  %v1264 = vsel %vm1260, %v1244, %v1247
  %v1265 = vsel %vm1263, %v1253, 2102212464
  %v1266 = vsel %vm1262, %v1250, %v1265
  %v1267 = vsel %vm1261, %v1264, %v1266
  %v1268 = vsel %vm1260, %v1247, %v1250
  %v1269 = vsel %vm1263, %v1256, 920167782
  %v1270 = vsel %vm1262, %v1253, %v1269
  %v1271 = vsel %vm1261, %v1268, %v1270
  %v1272 = vsel %vm1260, %v1250, %v1253
  %v1273 = vsel %vm1263, %v1259, 1326507024
  %v1274 = vsel %vm1262, %v1256, %v1273
  %v1275 = vsel %vm1261, %v1272, %v1274
  %v1276 = vshll.u32 %v1236, 8
  %v1277 = vmul.u32.u64.compose %v1276, %v1275
  %v1278 = vextract.low.u32 %v1277
  %v1279 = vextract.high.u32 %v1277
  %v1280 = vmul.u32.u64.compose %v1276, %v1271
  %v1281 = vextract.low.u32 %v1280
  %v1282 = vextract.high.u32 %v1280
  %v1283 = vmul.u32 %v1276, %v1267
  %v1284 = vadd.s32 %v1279, %v1281
  %vm1285 = vc.u32 %v1279, %v1281
  %v1286 = vadd.s32 %v1282, 1
  %v1287 = vsel %vm1285, %v1286, %v1282
  %v1288 = vadd.s32 %v1283, %v1287
  %v1289 = vadd.s32 %v1288, 536870912
  %v1290 = vshrl.u32 %v1289, 30
  %v1291 = vshll.u32 %v1290, 30
  %v1292 = vsub.s32 %v1288, %v1291
  %vm1293 = vcmp.lt.s32.totalorder %v1292, 0
  %v1294 = vsub.s32 0, %v1292
  %v1295 = vsel %vm1293, %v1294, %v1292
  %v1296 = vclz %v1295
  %v1297 = vsub.s32 %v1296, 2
  %vm1298 = vcmp.gt.s32.totalorder 0, %v1297
  %v1299 = vsel %vm1298, 0, %v1297
  %v1300 = vsub.s32 32, %v1299
  %v1301 = vshll.u32 %v1292, %v1299
  %v1302 = vshrl.u32 %v1284, %v1300
  %v1303 = vor.u32 %v1301, %v1302
  %v1304 = vsub.s32 4294967266, %v1299
  %v1305 = vadd.s32 %v1304, 127
  %v1306 = vshll.u32 %v1305, 23
  %v1307 = vor.u32 4788187, %v1306
  %v1308 = vand.u32 2147483647, %v1307
  %v1310 = vcvt.s32.f32 %v1303
  %v1311 = vmul.f32 %v1310, %v1308
  %v1312 = vxor.u32 %v1311, 2147483648
  %v1313 = vsel %vm1230, %v1312, %v1311
  %v1314 = vsub.s32 4, %v1290
  %v1315 = vsel %vm1230, %v1314, %v1290
  %v1316 = vsel %vm1229, %v64, %v1313
  %v1317 = vsel %vm1229, 0, %v1315
  %v1318 = vcosq.f32.pop %v1316
  %v1319 = vsinq.f32.pop %v1316
  %vm1320 = vweird.f32 %v64
  %v1321 = vand.u32 %v1317, 3
  %vm1322 = vcmp.lt.s32.totalorder %v1321, 2
  %vm1323 = vcmp.eq.s32.totalorder %v1321, 0
  %v1324 = vxor.u32 %v1319, 2147483648
  %v1325 = vsel %vm1323, %v1318, %v1324
  %vm1326 = vcmp.eq.s32.totalorder %v1321, 2
  %v1327 = vxor.u32 %v1318, 2147483648
  %v1328 = vsel %vm1326, %v1327, %v1319
  %v1329 = vsel %vm1322, %v1325, %v1328
  %v1330 = vsel %vm1320, nan, %v1329
  %v1331 = vmul.f32 %v192, %v83
  %v1332 = vmul.f32 %v296, %v84
  %v1333 = vmul.f32 %v400, %v85
  %v1334 = vmul.f32 %v504, %v86
  %v1335 = vmul.f32 %v608, %v87
  %v1336 = vmul.f32 %v712, %v88
  %1337 = vset.pattern.permute.xlu0 1
  %1338 = vperm.xlu0 %1337, %v30
  %v1339 = vpop.permute.xlu0 %1338
  %1341 = vset.pattern.permute.xlu0 1
  %1342 = vperm.xlu0 %1341, %v31
  %v1343 = vpop.permute.xlu0 %1342
  %1345 = vset.pattern.permute.xlu0 1
  %1346 = vperm.xlu0 %1345, %v32
  %v1347 = vpop.permute.xlu0 %1346
  %v1349 = vmul.f32 %v1331, %v1339
  %v1350 = vmul.f32 %v1332, %v1339
  %v1351 = vmul.f32 %v1333, %v1343
  %v1352 = vmul.f32 %v1334, %v1343
  %v1353 = vmul.f32 %v1335, %v1347
  %v1354 = vmul.f32 %v1336, %v1347
  %v1355 = vmul.f32 %v59, %v815
  %v1356 = vmul.f32 %v60, %v918
  %v1357 = vmul.f32 %v61, %v1021
  %v1358 = vmul.f32 %v62, %v1124
  %v1359 = vmul.f32 %v63, %v1227
  %v1360 = vmul.f32 %v64, %v1330
  %v1361 = vsub.f32 %v192, %v1355
  %v1362 = vsub.f32 %v296, %v1356
  %v1363 = vsub.f32 %v400, %v1357
  %v1364 = vsub.f32 %v504, %v1358
  %v1365 = vsub.f32 %v608, %v1359
  %v1366 = vsub.f32 %v712, %v1360
  %v1367 = vmul.f32 %v83, %v83
  %v1368 = vmul.f32 %v84, %v84
  %v1369 = vmul.f32 %v85, %v85
  %v1370 = vmul.f32 %v86, %v86
  %v1371 = vmul.f32 %v87, %v87
  %v1372 = vmul.f32 %v88, %v88
  %v1373 = vmul.f32 %v1361, %v1367
  %v1374 = vmul.f32 %v1362, %v1368
  %v1375 = vmul.f32 %v1363, %v1369
  %v1376 = vmul.f32 %v1364, %v1370
  %v1377 = vmul.f32 %v1365, %v1371
  %v1378 = vmul.f32 %v1366, %v1372
  %1379 = vset.pattern.permute.xlu0 2
  %1380 = vperm.xlu0 %1379, %v30
  %v1381 = vpop.permute.xlu0 %1380
  %1383 = vset.pattern.permute.xlu0 2
  %1384 = vperm.xlu0 %1383, %v31
  %v1385 = vpop.permute.xlu0 %1384
  %1387 = vset.pattern.permute.xlu0 2
  %1388 = vperm.xlu0 %1387, %v32
  %v1389 = vpop.permute.xlu0 %1388
  %v1391 = vmul.f32 %v1373, %v1381
  %v1392 = vmul.f32 %v1374, %v1381
  %v1393 = vmul.f32 %v1375, %v1385
  %v1394 = vmul.f32 %v1376, %v1385
  %v1395 = vmul.f32 %v1377, %v1389
  %v1396 = vmul.f32 %v1378, %v1389
  %v1397 = vadd.f32 %v1349, %v1391
  %v1398 = vadd.f32 %v1350, %v1392
  %v1399 = vadd.f32 %v1351, %v1393
  %v1400 = vadd.f32 %v1352, %v1394
  %v1401 = vadd.f32 %v1353, %v1395
  %v1402 = vadd.f32 %v1354, %v1396
  %v1403 = vmul.f32 %v59, %v59
  %v1404 = vmul.f32 %v60, %v60
  %v1405 = vmul.f32 %v61, %v61
  %v1406 = vmul.f32 %v62, %v62
  %v1407 = vmul.f32 %v63, %v63
  %v1408 = vmul.f32 %v64, %v64
  %v1409 = vmul.f32 %v1361, 3.0
  %v1410 = vmul.f32 %v1362, 3.0
  %v1411 = vmul.f32 %v1363, 3.0
  %v1412 = vmul.f32 %v1364, 3.0
  %v1413 = vmul.f32 %v1365, 3.0
  %v1414 = vmul.f32 %v1366, 3.0
  %v1415 = vmul.f32 %v1403, %v192
  %v1416 = vmul.f32 %v1404, %v296
  %v1417 = vmul.f32 %v1405, %v400
  %v1418 = vmul.f32 %v1406, %v504
  %v1419 = vmul.f32 %v1407, %v608
  %v1420 = vmul.f32 %v1408, %v712
  %v1421 = vsub.f32 %v1409, %v1415
  %v1422 = vsub.f32 %v1410, %v1416
  %v1423 = vsub.f32 %v1411, %v1417
  %v1424 = vsub.f32 %v1412, %v1418
  %v1425 = vsub.f32 %v1413, %v1419
  %v1426 = vsub.f32 %v1414, %v1420
  %v1427 = vmul.f32 %v1367, %v83
  %v1428 = vmul.f32 %v1368, %v84
  %v1429 = vmul.f32 %v1369, %v85
  %v1430 = vmul.f32 %v1370, %v86
  %v1431 = vmul.f32 %v1371, %v87
  %v1432 = vmul.f32 %v1372, %v88
  %v1433 = vmul.f32 %v1421, %v1427
  %v1434 = vmul.f32 %v1422, %v1428
  %v1435 = vmul.f32 %v1423, %v1429
  %v1436 = vmul.f32 %v1424, %v1430
  %v1437 = vmul.f32 %v1425, %v1431
  %v1438 = vmul.f32 %v1426, %v1432
  %1439 = vset.pattern.permute.xlu0 3
  %1440 = vperm.xlu0 %1439, %v30
  %v1441 = vpop.permute.xlu0 %1440
  %1443 = vset.pattern.permute.xlu0 3
  %1444 = vperm.xlu0 %1443, %v31
  %v1445 = vpop.permute.xlu0 %1444
  %1447 = vset.pattern.permute.xlu0 3
  %1448 = vperm.xlu0 %1447, %v32
  %v1449 = vpop.permute.xlu0 %1448
  %v1451 = vmul.f32 %v1433, %v1441
  %v1452 = vmul.f32 %v1434, %v1441
  %v1453 = vmul.f32 %v1435, %v1445
  %v1454 = vmul.f32 %v1436, %v1445
  %v1455 = vmul.f32 %v1437, %v1449
  %v1456 = vmul.f32 %v1438, %v1449
  %v1457 = vadd.f32 %v1397, %v1451
  %v1458 = vadd.f32 %v1398, %v1452
  %v1459 = vadd.f32 %v1399, %v1453
  %v1460 = vadd.f32 %v1400, %v1454
  %v1461 = vadd.f32 %v1401, %v1455
  %v1462 = vadd.f32 %v1402, %v1456
  %v1463 = vand.u32 2147483647, %v14
  %vm1464 = vcmp.le.f32.partialorder %v1463, 0.7853982
  %vm1465 = vcmp.lt.s32.totalorder %v14, 0
  %v1466 = vand.u32 %v14, 2139095040
  %v1467 = vshrl.u32 %v1466, 23
  %v1468 = vsub.s32 %v1467, 127
  %v1469 = vand.u32 2147483647, %v14
  %v1470 = vand.u32 %v1469, 8388607
  %v1471 = vor.u32 %v1470, 8388608
  %v1472 = vsub.s32 0, %v1471
  %v1473 = vadd.s32 %v1468, 1
  %vm1474 = vcmp.gt.s32.totalorder %v1473, 0
  %v1475 = vsel %vm1474, %v1473, 0
  %v1476 = vshrl.u32 %v1475, 5
  %v1477 = vand.u32 %v1475, 31
  %v1478 = vsub.s32 32, %v1477
  %v1479 = vshrl.u32 683565275, %v1478
  %v1480 = vshll.u32 683565275, %v1477
  %v1481 = vshrl.u32 2475754826, %v1478
  %v1482 = vor.u32 %v1480, %v1481
  %v1483 = vshll.u32 2475754826, %v1477
  %v1484 = vshrl.u32 2131351028, %v1478
  %v1485 = vor.u32 %v1483, %v1484
  %v1486 = vshll.u32 2131351028, %v1477
  %v1487 = vshrl.u32 2102212464, %v1478
  %v1488 = vor.u32 %v1486, %v1487
  %v1489 = vshll.u32 2102212464, %v1477
  %v1490 = vshrl.u32 920167782, %v1478
  %v1491 = vor.u32 %v1489, %v1490
  %v1492 = vshll.u32 920167782, %v1477
  %v1493 = vshrl.u32 1326507024, %v1478
  %v1494 = vor.u32 %v1492, %v1493
  %vm1495 = vcmp.lt.s32.totalorder %v1476, 1
  %vm1496 = vcmp.lt.s32.totalorder %v1476, 2
  %vm1497 = vcmp.lt.s32.totalorder %v1476, 3
  %vm1498 = vcmp.lt.s32.totalorder %v1476, 4
  %v1499 = vsel %vm1495, %v1479, %v1482
  %v1500 = vsel %vm1498, %v1488, 2102212464
  %v1501 = vsel %vm1497, %v1485, %v1500
  %v1502 = vsel %vm1496, %v1499, %v1501
  %v1503 = vsel %vm1495, %v1482, %v1485
  %v1504 = vsel %vm1498, %v1491, 920167782
  %v1505 = vsel %vm1497, %v1488, %v1504
  %v1506 = vsel %vm1496, %v1503, %v1505
  %v1507 = vsel %vm1495, %v1485, %v1488
  %v1508 = vsel %vm1498, %v1494, 1326507024
  %v1509 = vsel %vm1497, %v1491, %v1508
  %v1510 = vsel %vm1496, %v1507, %v1509
  %v1511 = vshll.u32 %v1471, 8
  %v1512 = vmul.u32.u64.compose %v1511, %v1510
  %v1513 = vextract.low.u32 %v1512
  %v1514 = vextract.high.u32 %v1512
  %v1515 = vmul.u32.u64.compose %v1511, %v1506
  %v1516 = vextract.low.u32 %v1515
  %v1517 = vextract.high.u32 %v1515
  %v1518 = vmul.u32 %v1511, %v1502
  %v1519 = vadd.s32 %v1514, %v1516
  %vm1520 = vc.u32 %v1514, %v1516
  %v1521 = vadd.s32 %v1517, 1
  %v1522 = vsel %vm1520, %v1521, %v1517
  %v1523 = vadd.s32 %v1518, %v1522
  %v1524 = vadd.s32 %v1523, 536870912
  %v1525 = vshrl.u32 %v1524, 30
  %v1526 = vshll.u32 %v1525, 30
  %v1527 = vsub.s32 %v1523, %v1526
  %vm1528 = vcmp.lt.s32.totalorder %v1527, 0
  %v1529 = vsub.s32 0, %v1527
  %v1530 = vsel %vm1528, %v1529, %v1527
  %v1531 = vclz %v1530
  %v1532 = vsub.s32 %v1531, 2
  %vm1533 = vcmp.gt.s32.totalorder 0, %v1532
  %v1534 = vsel %vm1533, 0, %v1532
  %v1535 = vsub.s32 32, %v1534
  %v1536 = vshll.u32 %v1527, %v1534
  %v1537 = vshrl.u32 %v1519, %v1535
  %v1538 = vor.u32 %v1536, %v1537
  %v1539 = vsub.s32 4294967266, %v1534
  %v1540 = vadd.s32 %v1539, 127
  %v1541 = vshll.u32 %v1540, 23
  %v1542 = vor.u32 4788187, %v1541
  %v1543 = vand.u32 2147483647, %v1542
  %v1545 = vcvt.s32.f32 %v1538
  %v1546 = vmul.f32 %v1545, %v1543
  %v1547 = vxor.u32 %v1546, 2147483648
  %v1548 = vsel %vm1465, %v1547, %v1546
  %v1549 = vsub.s32 4, %v1525
  %v1550 = vsel %vm1465, %v1549, %v1525
  %v1551 = vsel %vm1464, %v14, %v1548
  %v1552 = vsel %vm1464, 0, %v1550
  %v1553 = vcosq.f32.pop %v1551
  %v1554 = vsinq.f32.pop %v1551
  %vm1555 = vweird.f32 %v14
  %v1556 = vand.u32 %v1552, 3
  %vm1557 = vcmp.lt.s32.totalorder %v1556, 2
  %vm1558 = vcmp.eq.s32.totalorder %v1556, 0
  %v1559 = vxor.u32 %v1554, 2147483648
  %v1560 = vsel %vm1558, %v1553, %v1559
  %vm1561 = vcmp.eq.s32.totalorder %v1556, 2
  %v1562 = vxor.u32 %v1553, 2147483648
  %v1563 = vsel %vm1561, %v1562, %v1554
  %v1564 = vsel %vm1557, %v1560, %v1563
  %v1565 = vsel %vm1555, nan, %v1564
  %1566 = vset.pattern.permute.xlu0 4
  %1567 = vperm.xlu0 %1566, %v30
  %v1568 = vpop.permute.xlu0 %1567
  %1570 = vset.pattern.permute.xlu0 4
  %1571 = vperm.xlu0 %1570, %v31
  %v1572 = vpop.permute.xlu0 %1571
  %1574 = vset.pattern.permute.xlu0 4
  %1575 = vperm.xlu0 %1574, %v32
  %v1576 = vpop.permute.xlu0 %1575
  %1578 = vset.pattern.permute.xlu0 5
  %1579 = vperm.xlu0 %1578, %v30
  %v1580 = vpop.permute.xlu0 %1579
  %1582 = vset.pattern.permute.xlu0 5
  %1583 = vperm.xlu0 %1582, %v31
  %v1584 = vpop.permute.xlu0 %1583
  %1586 = vset.pattern.permute.xlu0 5
  %1587 = vperm.xlu0 %1586, %v32
  %v1588 = vpop.permute.xlu0 %1587
  %v1591 = vlaneseq
  %v1592 = vshrl.u32 %v1591, 7
  %v1593 = vsub.s32 0, %v1592
  %v1594 = vrot.slane %v1565, %v1593
  %v1595 = vlaneseq
  %v1596 = vshrl.u32 %v1595, 7
  %v1597 = vsub.s32 1, %v1596
  %v1598 = vrot.slane %v1565, %v1597
  %v1601 = vmul.f32 %v1580, %v1594
  %v1602 = vmul.f32 %v1580, %v1598
  %v1603 = vmul.f32 %v1584, %v1594
  %v1604 = vmul.f32 %v1584, %v1598
  %v1605 = vmul.f32 %v1588, %v1594
  %v1606 = vmul.f32 %v1588, %v1598
  %v1607 = vadd.f32 %v1568, %v1601
  %v1608 = vadd.f32 %v1568, %v1602
  %v1609 = vadd.f32 %v1572, %v1603
  %v1610 = vadd.f32 %v1572, %v1604
  %v1611 = vadd.f32 %v1576, %v1605
  %v1612 = vadd.f32 %v1576, %v1606
  %v1613 = vmul.f32 %v1565, 3.0
  %v1614 = vmul.f32 %v1613, %v1565
  %v1615 = vsub.f32 %v1614, 1.0
  %v1616 = vmul.f32 %v1615, 0.5
  %1617 = vset.pattern.permute.xlu0 6
  %1618 = vperm.xlu0 %1617, %v30
  %v1619 = vpop.permute.xlu0 %1618
  %1621 = vset.pattern.permute.xlu0 6
  %1622 = vperm.xlu0 %1621, %v31
  %v1623 = vpop.permute.xlu0 %1622
  %1625 = vset.pattern.permute.xlu0 6
  %1626 = vperm.xlu0 %1625, %v32
  %v1627 = vpop.permute.xlu0 %1626
  %v1630 = vlaneseq
  %v1631 = vshrl.u32 %v1630, 7
  %v1632 = vsub.s32 0, %v1631
  %v1633 = vrot.slane %v1616, %v1632
  %v1634 = vlaneseq
  %v1635 = vshrl.u32 %v1634, 7
  %v1636 = vsub.s32 1, %v1635
  %v1637 = vrot.slane %v1616, %v1636
  %v1640 = vmul.f32 %v1619, %v1633
  %v1641 = vmul.f32 %v1619, %v1637
  %v1642 = vmul.f32 %v1623, %v1633
  %v1643 = vmul.f32 %v1623, %v1637
  %v1644 = vmul.f32 %v1627, %v1633
  %v1645 = vmul.f32 %v1627, %v1637
  %v1646 = vadd.f32 %v1607, %v1640
  %v1647 = vadd.f32 %v1608, %v1641
  %v1648 = vadd.f32 %v1609, %v1642
  %v1649 = vadd.f32 %v1610, %v1643
  %v1650 = vadd.f32 %v1611, %v1644
  %v1651 = vadd.f32 %v1612, %v1645
  %v1653 = vlaneseq
  %v1654 = vshrl.u32 %v1653, 7
  %v1655 = vsub.s32 0, %v1654
  %v1656 = vrot.slane %v29, %v1655
  %v1657 = vlaneseq
  %v1658 = vshrl.u32 %v1657, 7
  %v1659 = vsub.s32 1, %v1658
  %v1660 = vrot.slane %v29, %v1659
  %v1663 = vmul.f32 %v1656, %v1457
  %v1664 = vmul.f32 %v1660, %v1458
  %v1665 = vmul.f32 %v1656, %v1459
  %v1666 = vmul.f32 %v1660, %v1460
  %v1667 = vmul.f32 %v1656, %v1461
  %v1668 = vmul.f32 %v1660, %v1462
  %v1669 = vmul.f32 %v1663, %v1646
  %v1670 = vmul.f32 %v1664, %v1647
  %v1671 = vmul.f32 %v1665, %v1648
  %v1672 = vmul.f32 %v1666, %v1649
  %v1673 = vmul.f32 %v1667, %v1650
  %v1674 = vmul.f32 %v1668, %v1651
  %1675 = vst [vmem:[%s2] sm:$0xff] %v1669
  %1676 = vst [vmem:[%s2 + $0x8] sm:$0xff] %v1670
  %1677 = vst [vmem:[%s2 + $0x10] sm:$0xff] %v1671
  %1678 = vst [vmem:[%s2 + $0x18] sm:$0xff] %v1672
  %1679 = vst [vmem:[%s2 + $0x20] sm:$0xff] %v1673
  %1680 = vst [vmem:[%s2 + $0x28] sm:$0xff] %v1674
  // Predicated region
  $region10: #{_forward.1} parent=0 // pred_check
    _
  $region11: #{_forward.1} parent=0 // pred_check_branch
    %1682 = sbr.rel (0) target = $region13
  $region12: #{_forward.1} parent=0 // pred_region
    _
  $region13: #{_forward.1} parent=0 // pred_fallthru
    _
  // Predicated region
  $region14: #{_forward.1} parent=0 // pred_check
    _
  $region15: #{_forward.1} parent=0 // pred_check_branch
    %1684 = sbr.rel (0) target = $region17
  $region16: #{_forward.1} parent=0 // pred_region
    _
  $region17: #{_forward.1} parent=0 // pred_fallthru
    _

</llo_original>
